<compile_context>
chip_gen: v5e
topology: v5e:2x2
jax: 0.10.0
libtpu: 0.0.40
codegen_flags: <defaults>
</compile_context>

<pallas_src>
import jax
import jax.numpy as jnp
import numpy as np
from jax import lax
from jax.experimental import pallas as pl
from jax.experimental.pallas import tpu as pltpu


def _round_up(x, m):
    return ((x + m - 1) // m) * m


# ----------------------------- fused Pallas kernel -------------------------- #

def _caption_lstm_kernel(x_ref, wih_ref, whh_ref, bl_ref, wlin_ref, blin_ref,
                         out_ref, h_sc, c_sc, hall_sc, gx_sc):
    """One grid step == one (batch block, time tile) pair.

    x_ref    : (Tt, Bq, Ep)    time-major input tile (compute dtype)
    wih_ref  : (Ep, 4*Hp)      input->gates weights (gate order i,f,g,o; padded)
    whh_ref  : (Hp, 4*Hp)      hidden->gates weights
    bl_ref   : (1, 4*Hp)       folded LSTM bias (b_ih + b_hh), f32
    wlin_ref : (Hp, Vp)        vocab projection weights
    blin_ref : (1, Vp)         vocab projection bias, f32
    out_ref  : (Tt, Bq, Vp)    per-step logits (f32)
    h_sc/c_sc: (Bq, Hp)        recurrent state, persists across time tiles
    hall_sc  : (Tt, Bq, Hp)    per-step hidden states for this tile
    gx_sc    : (Tt, Bq, 4*Hp)  precomputed input projection for this tile
    """
    Tt, Bq, Ep = x_ref.shape
    Hp = h_sc.shape[-1]
    Vp = out_ref.shape[-1]

    # A new batch block (grid axis 0) starts a fresh recurrence at time tile 0.
    @pl.when(pl.program_id(1) == 0)
    def _():
        h_sc[...] = jnp.zeros_like(h_sc)
        c_sc[...] = jnp.zeros_like(c_sc)

    # Hoisted input projection + folded bias for the whole time tile:
    # one (Tt*Bq, Ep) x (Ep, 4Hp) MXU matmul instead of Tt tiny slivers.
    x2d = x_ref[...].reshape(Tt * Bq, Ep)
    gx = jnp.dot(x2d, wih_ref[...], preferred_element_type=jnp.float32)
    gx_sc[...] = (gx + bl_ref[...]).reshape(Tt, Bq, 4 * Hp)

    w_dtype = whh_ref.dtype

    def step(t, carry):
        # Recurrent part only: h_prev @ W_hh (x part precomputed above).
        gates = gx_sc[t] + jnp.dot(h_sc[...].astype(w_dtype), whh_ref[...],
                                   preferred_element_type=jnp.float32)
        # Hp is a multiple of 128 -> each gate slice is a full-lane slice.
        i = jax.nn.sigmoid(gates[:, 0 * Hp:1 * Hp])
        f = jax.nn.sigmoid(gates[:, 1 * Hp:2 * Hp])
        g = jnp.tanh(gates[:, 2 * Hp:3 * Hp])
        o = jax.nn.sigmoid(gates[:, 3 * Hp:4 * Hp])

        c_new = f * c_sc[...] + i * g
        h_new = o * jnp.tanh(c_new)
        c_sc[...] = c_new
        h_sc[...] = h_new
        hall_sc[t] = h_new        # no matmul / no HBM store on the serial path
        return carry

    # Bounded unroll: keeps vreg pressure in check at large Hp while still
    # amortizing loop overhead.
    lax.fori_loop(0, Tt, step, 0, unroll=min(4, Tt))

    # Hoisted vocab projection: one wide-M matmul + one bulk lane-dense store.
    h2d = hall_sc[...].reshape(Tt * Bq, Hp).astype(wlin_ref.dtype)
    logits = (jnp.dot(h2d, wlin_ref[...], preferred_element_type=jnp.float32)
              + blin_ref[...])
    out_ref[...] = logits.reshape(Tt, Bq, Vp).astype(out_ref.dtype)


def lstm_lm_pallas(x, wih, whh, b_lstm, wlin, blin, time_tile, batch_blocks):
    """x: (T1p, Bp, Ep) time-major, padded. Returns per-step logits (T1p, Bp, Vp)."""
    T1p, Bp, Ep = x.shape
    Hp = whh.shape[0]
    G = whh.shape[1]          # 4 * Hp
    Vp = wlin.shape[1]
    assert T1p % time_tile == 0
    assert Bp % batch_blocks == 0
    Tt = time_tile
    Bq = Bp // batch_blocks

    def const_spec(shape):
        # Grid-invariant weight: fetched once, never re-fetched -> single
        # buffer (halves weight VMEM residency; important on v7x's 64 MiB).
        return pl.BlockSpec(shape, lambda bh, s: (0, 0),
                            pipeline_mode=pl.Buffered(1))

    return pl.pallas_call(
        _caption_lstm_kernel,
        out_shape=jax.ShapeDtypeStruct((T1p, Bp, Vp), jnp.float32),
        grid_spec=pltpu.PrefetchScalarGridSpec(
            num_scalar_prefetch=0,
            # batch blocks are independent -> "parallel" (megacore on v7x);
            # time tiles carry h/c state -> "arbitrary" (sequential).
            grid=(batch_blocks, T1p // Tt),
            in_specs=[
                pl.BlockSpec((Tt, Bq, Ep), lambda bh, s: (s, bh, 0)),
                const_spec((Ep, G)),
                const_spec((Hp, G)),
                const_spec((1, G)),
                const_spec((Hp, Vp)),
                const_spec((1, Vp)),
            ],
            out_specs=pl.BlockSpec((Tt, Bq, Vp), lambda bh, s: (s, bh, 0)),
            scratch_shapes=[
                pltpu.VMEM((Bq, Hp), jnp.float32),            # h state
                pltpu.VMEM((Bq, Hp), jnp.float32),            # c state
                pltpu.VMEM((Tt, Bq, Hp), jnp.float32),        # per-step h
                pltpu.VMEM((Tt, Bq, G), jnp.float32),         # gates_x tile
            ],
        ),
        compiler_params=pltpu.CompilerParams(
            dimension_semantics=("parallel", "arbitrary"),
            vmem_limit_bytes=64 * 1024 * 1024,
        ),
    )(x, wih, whh, b_lstm, wlin, blin)


# ------------------------------ param preparation --------------------------- #

def prepare_decoder_params(word_embeddings, w_ih, w_hh, b_ih, b_hh, w_lin, b_lin,
                           compute_dtype=jnp.bfloat16):
    """Pad H/V/E to 128-lane multiples, transpose to matmul-friendly layout,
    fold the two LSTM biases, and cast weights to the MXU compute dtype
    (bf16 recommended; biases stay f32 — they are added post-matmul in f32)."""
    V, E = word_embeddings.shape
    H = w_hh.shape[1]
    Ep = _round_up(E, 128)
    Hp = _round_up(H, 128)
    Vp = _round_up(V, 128)

    def pad_gate_matrix(w, in_dim, in_pad):
        # w: (4H, in_dim), PyTorch gate row-block order i,f,g,o
        w4 = w.reshape(4, H, in_dim)
        w4 = jnp.pad(w4, ((0, 0), (0, Hp - H), (0, in_pad - in_dim)))
        return jnp.transpose(w4, (2, 0, 1)).reshape(in_pad, 4 * Hp)

    wih_p = pad_gate_matrix(w_ih, E, Ep).astype(compute_dtype)      # (Ep, 4Hp)
    whh_p = pad_gate_matrix(w_hh, H, Hp).astype(compute_dtype)      # (Hp, 4Hp)
    b = (b_ih + b_hh).reshape(4, H)
    b_p = jnp.pad(b, ((0, 0), (0, Hp - H))).reshape(1, 4 * Hp).astype(jnp.float32)
    wlin_p = jnp.pad(w_lin.T, ((0, Hp - H), (0, Vp - V))).astype(compute_dtype)
    blin_p = jnp.pad(b_lin, (0, Vp - V)).reshape(1, Vp).astype(jnp.float32)

    return dict(word_embeddings=word_embeddings,
                wih=wih_p, whh=whh_p, b_lstm=b_p,
                wlin=wlin_p, blin=blin_p,
                compute_dtype=compute_dtype,
                dims=(E, H, V, Ep, Hp, Vp))


# ------------------------------ model forward ------------------------------- #

def _packed_indices(lengths, T1):
    """pack_padded_sequence ordering (batch_first=True, enforce_sorted=True):
    for each time t, every batch b with lengths[b] > t, in batch order."""
    t_idx, b_idx = [], []
    for t in range(T1):
        for b, L in enumerate(lengths):
            if L > t:
                t_idx.append(t)
                b_idx.append(b)
    return (jnp.asarray(t_idx, jnp.int32), jnp.asarray(b_idx, jnp.int32))


def caption_decoder_forward(prep, image_embeddings, captions, lengths,
                            time_tile=8, batch_blocks=2):
    lengths = [int(l) for l in lengths]
    assert all(lengths[i] >= lengths[i + 1] for i in range(len(lengths) - 1)), \
        "pack_padded_sequence(enforce_sorted=True) requires descending lengths"

    E, H, V, Ep, Hp, Vp = prep["dims"]
    cdt = prep["compute_dtype"]
    B, T = captions.shape
    T1 = T + 1

    # Per-block batch padding: 16-row sublane tiles for 2-byte dtypes, else 8.
    sub = 16 if jnp.dtype(cdt).itemsize == 2 else 8
    Bq = _round_up((B + batch_blocks - 1) // batch_blocks, sub)
    Bp = Bq * batch_blocks

    # Embedding lookup + image feature prepend (glue, plain JAX)
    emb = prep["word_embeddings"][captions]                          # (B, T, E)
    seq = jnp.concatenate([image_embeddings[:, None, :], emb], 1)    # (B, T1, E)
    # TODO(synk): fold this transpose+pad into the kernel (index_map reorder or
    # scalar-prefetched caption ids + pl.Element gather) to avoid an extra HBM
    # pass over the activations at production sizes.
    x = jnp.transpose(seq, (1, 0, 2)).astype(cdt)                    # (T1, B, E)

    # Pad time / batch / embedding dims; zero padding is exactly neutral for
    # the (padded) LSTM + linear (padded h/c columns stay 0, padded rows are
    # never gathered, padded vocab columns are sliced off).
    Tt = min(time_tile, T1)
    T1p = _round_up(T1, Tt)
    x = jnp.pad(x, ((0, T1p - T1), (0, Bp - B), (0, Ep - E)))

    # Fused LSTM recurrence + hoisted vocab projection in one Pallas kernel
    logits = lstm_lm_pallas(x, prep["wih"], prep["whh"], prep["b_lstm"],
                            prep["wlin"], prep["blin"], Tt, batch_blocks)

    # Emulate pack_padded_sequence: gather valid (t, b) rows in packed order
    t_idx, b_idx = _packed_indices(lengths, T1)
    return logits[t_idx, b_idx][:, :V]                               # (sum(len), V)


# ----------------------------- pure-JAX reference --------------------------- #

def reference_forward(word_embeddings, w_ih, w_hh, b_ih, b_hh, w_lin, b_lin,
                      image_embeddings, captions, lengths):
    lengths = [int(l) for l in lengths]
    emb = word_embeddings[captions]
    seq = jnp.concatenate([image_embeddings[:, None, :], emb], 1)
    x = jnp.transpose(seq, (1, 0, 2)).astype(jnp.float32)
    T1, B, _ = x.shape
    H = w_hh.shape[1]

    def step(carry, xt):
        h, c = carry
        gates = xt @ w_ih.T + h @ w_hh.T + b_ih + b_hh
        i = jax.nn.sigmoid(gates[:, 0 * H:1 * H])
        f = jax.nn.sigmoid(gates[:, 1 * H:2 * H])
        g = jnp.tanh(gates[:, 2 * H:3 * H])
        o = jax.nn.sigmoid(gates[:, 3 * H:4 * H])
        c = f * c + i * g
        h = o * jnp.tanh(c)
        return (h, c), h

    init = (jnp.zeros((B, H), jnp.float32), jnp.zeros((B, H), jnp.float32))
    _, h_all = jax.lax.scan(step, init, x)
    t_idx, b_idx = _packed_indices(lengths, T1)
    return h_all[t_idx, b_idx] @ w_lin.T + b_lin


# ----------------------------------- main ----------------------------------- #

if __name__ == "__main__":
    # Small shapes consistent with the module's forward
    B, T = 4, 7            # batch, caption length (sequence becomes T+1)
    E, H, V = 32, 32, 64   # embedding_size, hidden_size, vocab_size
    lengths = [8, 6, 5, 3]  # descending, each <= T+1

    key = jax.random.PRNGKey(0)
    ks = jax.random.split(key, 9)

    # Raw parameters in PyTorch layout
    word_embeddings = jax.random.normal(ks[0], (V, E), jnp.float32) * 0.1
    w_ih = jax.random.normal(ks[1], (4 * H, E), jnp.float32) * 0.1   # weight_ih_l0
    w_hh = jax.random.normal(ks[2], (4 * H, H), jnp.float32) * 0.1   # weight_hh_l0
    b_ih = jax.random.normal(ks[3], (4 * H,), jnp.float32) * 0.1
    b_hh = jax.random.normal(ks[4], (4 * H,), jnp.float32) * 0.1
    w_lin = jax.random.normal(ks[5], (V, H), jnp.float32) * 0.1      # Linear.weight
    b_lin = jax.random.normal(ks[6], (V,), jnp.float32) * 0.1

    image_embeddings = jax.random.normal(ks[7], (B, E), jnp.float32)
    captions = jax.random.randint(ks[8], (B, T), 0, V, jnp.int32)

    ref = reference_forward(word_embeddings, w_ih, w_hh, b_ih, b_hh,
                            w_lin, b_lin, image_embeddings, captions, lengths)

    # 1) Exact-mode validation (f32 weights/activations, tight tolerance).
    #    time_tile=4 -> 2 sequential time tiles (exercises h/c carry across
    #    grid steps); batch_blocks=2 -> leading parallel (megacore) axis.
    prep_f32 = prepare_decoder_params(word_embeddings, w_ih, w_hh, b_ih, b_hh,
                                      w_lin, b_lin, compute_dtype=jnp.float32)
    out_f32 = caption_decoder_forward(prep_f32, image_embeddings, captions,
                                      lengths, time_tile=4, batch_blocks=2)
    out_f32 = jax.block_until_ready(out_f32)
    assert out_f32.shape == (sum(lengths), V), out_f32.shape
    np.testing.assert_allclose(np.asarray(out_f32), np.asarray(ref),
                               atol=1e-4, rtol=1e-4)

    # 2) Production config (bf16 weights/activations, f32 accumulation) —
    #    sanity check against the f32 reference with bf16-appropriate tolerance.
    prep_bf16 = prepare_decoder_params(word_embeddings, w_ih, w_hh, b_ih, b_hh,
                                       w_lin, b_lin, compute_dtype=jnp.bfloat16)
    out_bf16 = caption_decoder_forward(prep_bf16, image_embeddings, captions,
                                       lengths, time_tile=4, batch_blocks=2)
    out_bf16 = jax.block_until_ready(out_bf16)
    assert out_bf16.shape == (sum(lengths), V), out_bf16.shape
    np.testing.assert_allclose(np.asarray(out_bf16), np.asarray(ref),
                               atol=5e-2, rtol=5e-2)

    print("KERNEL_OK")
</pallas_src>

<mosaic_0001>
module attributes {stable_mosaic.version = 11 : i64} {
  func.func @_caption_lstm_kernel(%arg0: i32, %arg1: i32, %arg2: memref<4x8x128xf32, #tpu.memory_space<vmem>>, %arg3: memref<128x512xf32, #tpu.memory_space<vmem>>, %arg4: memref<128x512xf32, #tpu.memory_space<vmem>>, %arg5: memref<1x512xf32, #tpu.memory_space<vmem>>, %arg6: memref<128x128xf32, #tpu.memory_space<vmem>>, %arg7: memref<1x128xf32, #tpu.memory_space<vmem>>, %arg8: memref<4x8x128xf32, #tpu.memory_space<vmem>>, %arg9: memref<8x128xf32, #tpu.memory_space<vmem>>, %arg10: memref<8x128xf32, #tpu.memory_space<vmem>>, %arg11: memref<4x8x128xf32, #tpu.memory_space<vmem>>, %arg12: memref<4x8x512xf32, #tpu.memory_space<vmem>>) attributes {dimension_semantics = [#tpu.dimension_semantics<parallel>, #tpu.dimension_semantics<arbitrary>], iteration_bounds = array<i64: 2, 2>, scalar_prefetch = 0 : i64, scratch_operands = 4 : i64, tpu.core_type = #tpu.core_type<tc>, window_params = [{transform_indices = @transform_0, window_bounds = array<i64: 4, 8, 128>}, {pipeline_mode = #tpu.pipeline_mode<synchronous>, transform_indices = @transform_1, window_bounds = array<i64: 128, 512>}, {pipeline_mode = #tpu.pipeline_mode<synchronous>, transform_indices = @transform_2, window_bounds = array<i64: 128, 512>}, {pipeline_mode = #tpu.pipeline_mode<synchronous>, transform_indices = @transform_3, window_bounds = array<i64: 1, 512>}, {pipeline_mode = #tpu.pipeline_mode<synchronous>, transform_indices = @transform_4, window_bounds = array<i64: 128, 128>}, {pipeline_mode = #tpu.pipeline_mode<synchronous>, transform_indices = @transform_5, window_bounds = array<i64: 1, 128>}, {transform_indices = @transform_6, window_bounds = array<i64: 4, 8, 128>}]} {
    %c0_i32 = arith.constant 0 : i32
    %0 = arith.cmpi eq, %arg1, %c0_i32 : i32
    %1 = arith.extui %0 : i1 to i32
    %c0_i32_0 = arith.constant 0 : i32
    %2 = arith.cmpi ne, %1, %c0_i32_0 : i32
    scf.if %2 {
      %cst_94 = arith.constant 0.000000e+00 : f32
      %177 = vector.broadcast %cst_94 : f32 to vector<8x128xf32>
      %c0_95 = arith.constant 0 : index
      %c0_96 = arith.constant 0 : index
      %178 = vector.load %arg9[%c0_95, %c0_96] : memref<8x128xf32, #tpu.memory_space<vmem>>, vector<8x128xf32>
      tpu.vector_store %arg9[%c0_95, %c0_96], %177 {strides = array<i32>} : memref<8x128xf32, #tpu.memory_space<vmem>>, vector<8x128xf32>,
      %cst_97 = arith.constant 0.000000e+00 : f32
      %179 = vector.broadcast %cst_97 : f32 to vector<8x128xf32>
      %c0_98 = arith.constant 0 : index
      %c0_99 = arith.constant 0 : index
      %180 = vector.load %arg10[%c0_98, %c0_99] : memref<8x128xf32, #tpu.memory_space<vmem>>, vector<8x128xf32>
      tpu.vector_store %arg10[%c0_98, %c0_99], %179 {strides = array<i32>} : memref<8x128xf32, #tpu.memory_space<vmem>>, vector<8x128xf32>,
    } else {
    }
    %c0 = arith.constant 0 : index
    %c0_1 = arith.constant 0 : index
    %c0_2 = arith.constant 0 : index
    %3 = vector.load %arg2[%c0, %c0_1, %c0_2] : memref<4x8x128xf32, #tpu.memory_space<vmem>>, vector<4x8x128xf32>
    %4 = vector.shape_cast %3 : vector<4x8x128xf32> to vector<32x128xf32>
    %c0_3 = arith.constant 0 : index
    %c0_4 = arith.constant 0 : index
    %5 = vector.load %arg3[%c0_3, %c0_4] : memref<128x512xf32, #tpu.memory_space<vmem>>, vector<128x512xf32>
    %cst = arith.constant dense<0.000000e+00> : vector<32x512xf32>
    %6 = tpu.matmul %4, %5, %cst {dimension_numbers = #tpu.dot_dimension_numbers<[1], [0], [0], [1], [0, 0, 1, 1], [], []>} : vector<32x128xf32>, vector<128x512xf32>, vector<32x512xf32> -> vector<32x512xf32>
    %c0_5 = arith.constant 0 : index
    %c0_6 = arith.constant 0 : index
    %7 = vector.load %arg5[%c0_5, %c0_6] : memref<1x512xf32, #tpu.memory_space<vmem>>, vector<1x512xf32>
    %8 = vector.broadcast %7 : vector<1x512xf32> to vector<32x512xf32>
    %9 = arith.addf %6, %8 : vector<32x512xf32>
    %10 = vector.shape_cast %9 : vector<32x512xf32> to vector<4x8x512xf32>
    %c0_7 = arith.constant 0 : index
    %c0_8 = arith.constant 0 : index
    %c0_9 = arith.constant 0 : index
    %11 = vector.load %arg12[%c0_7, %c0_8, %c0_9] : memref<4x8x512xf32, #tpu.memory_space<vmem>>, vector<4x8x512xf32>
    tpu.vector_store %arg12[%c0_7, %c0_8, %c0_9], %10 {strides = array<i32>} : memref<4x8x512xf32, #tpu.memory_space<vmem>>, vector<4x8x512xf32>,
    %c0_i32_10 = arith.constant 0 : i32
    %12 = arith.index_cast %c0_i32_10 : i32 to index
    %c0_11 = arith.constant 0 : index
    %c0_12 = arith.constant 0 : index
    %13 = vector.load %arg12[%12, %c0_11, %c0_12] : memref<4x8x512xf32, #tpu.memory_space<vmem>>, vector<1x8x512xf32>
    %14 = vector.shape_cast %13 : vector<1x8x512xf32> to vector<8x512xf32>
    %c0_13 = arith.constant 0 : index
    %c0_14 = arith.constant 0 : index
    %15 = vector.load %arg9[%c0_13, %c0_14] : memref<8x128xf32, #tpu.memory_space<vmem>>, vector<8x128xf32>
    %c0_15 = arith.constant 0 : index
    %c0_16 = arith.constant 0 : index
    %16 = vector.load %arg4[%c0_15, %c0_16] : memref<128x512xf32, #tpu.memory_space<vmem>>, vector<128x512xf32>
    %cst_17 = arith.constant dense<0.000000e+00> : vector<8x512xf32>
    %17 = tpu.matmul %15, %16, %cst_17 {dimension_numbers = #tpu.dot_dimension_numbers<[1], [0], [0], [1], [0, 0, 1, 1], [], []>} : vector<8x128xf32>, vector<128x512xf32>, vector<8x512xf32> -> vector<8x512xf32>
    %18 = arith.addf %14, %17 : vector<8x512xf32>
    %19 = vector.extract_strided_slice %18 {offsets = [0, 0], sizes = [8, 128], strides = [1, 1]} : vector<8x512xf32> to vector<8x128xf32>
    %20 = arith.negf %19 : vector<8x128xf32>
    %21 = math.exp %20 : vector<8x128xf32>
    %cst_18 = arith.constant 1.000000e+00 : f32
    %22 = vector.broadcast %cst_18 : f32 to vector<8x128xf32>
    %23 = arith.addf %22, %21 : vector<8x128xf32>
    %24 = arith.divf %22, %23 : vector<8x128xf32>
    %25 = vector.extract_strided_slice %18 {offsets = [0, 128], sizes = [8, 128], strides = [1, 1]} : vector<8x512xf32> to vector<8x128xf32>
    %26 = arith.negf %25 : vector<8x128xf32>
    %27 = math.exp %26 : vector<8x128xf32>
    %cst_19 = arith.constant 1.000000e+00 : f32
    %28 = vector.broadcast %cst_19 : f32 to vector<8x128xf32>
    %29 = arith.addf %28, %27 : vector<8x128xf32>
    %30 = arith.divf %28, %29 : vector<8x128xf32>
    %31 = vector.extract_strided_slice %18 {offsets = [0, 256], sizes = [8, 128], strides = [1, 1]} : vector<8x512xf32> to vector<8x128xf32>
    %32 = math.tanh %31 : vector<8x128xf32>
    %33 = vector.extract_strided_slice %18 {offsets = [0, 384], sizes = [8, 128], strides = [1, 1]} : vector<8x512xf32> to vector<8x128xf32>
    %34 = arith.negf %33 : vector<8x128xf32>
    %35 = math.exp %34 : vector<8x128xf32>
    %cst_20 = arith.constant 1.000000e+00 : f32
    %36 = vector.broadcast %cst_20 : f32 to vector<8x128xf32>
    %37 = arith.addf %36, %35 : vector<8x128xf32>
    %38 = arith.divf %36, %37 : vector<8x128xf32>
    %c0_21 = arith.constant 0 : index
    %c0_22 = arith.constant 0 : index
    %39 = vector.load %arg10[%c0_21, %c0_22] : memref<8x128xf32, #tpu.memory_space<vmem>>, vector<8x128xf32>
    %40 = arith.mulf %30, %39 : vector<8x128xf32>
    %41 = arith.mulf %24, %32 : vector<8x128xf32>
    %42 = arith.addf %40, %41 : vector<8x128xf32>
    %43 = math.tanh %42 : vector<8x128xf32>
    %44 = arith.mulf %38, %43 : vector<8x128xf32>
    %c0_23 = arith.constant 0 : index
    %c0_24 = arith.constant 0 : index
    %45 = vector.load %arg10[%c0_23, %c0_24] : memref<8x128xf32, #tpu.memory_space<vmem>>, vector<8x128xf32>
    tpu.vector_store %arg10[%c0_23, %c0_24], %42 {strides = array<i32>} : memref<8x128xf32, #tpu.memory_space<vmem>>, vector<8x128xf32>,
    %c0_25 = arith.constant 0 : index
    %c0_26 = arith.constant 0 : index
    %46 = vector.load %arg9[%c0_25, %c0_26] : memref<8x128xf32, #tpu.memory_space<vmem>>, vector<8x128xf32>
    tpu.vector_store %arg9[%c0_25, %c0_26], %44 {strides = array<i32>} : memref<8x128xf32, #tpu.memory_space<vmem>>, vector<8x128xf32>,
    %47 = arith.index_cast %c0_i32_10 : i32 to index
    %c0_27 = arith.constant 0 : index
    %c0_28 = arith.constant 0 : index
    %48 = vector.load %arg11[%47, %c0_27, %c0_28] : memref<4x8x128xf32, #tpu.memory_space<vmem>>, vector<1x8x128xf32>
    %49 = vector.shape_cast %48 : vector<1x8x128xf32> to vector<8x128xf32>
    %50 = vector.shape_cast %44 : vector<8x128xf32> to vector<1x8x128xf32>
    tpu.vector_store %arg11[%47, %c0_27, %c0_28], %50 {strides = array<i32>} : memref<4x8x128xf32, #tpu.memory_space<vmem>>, vector<1x8x128xf32>,
    %c1_i32 = arith.constant 1 : i32
    %51 = arith.index_cast %c1_i32 : i32 to index
    %c0_29 = arith.constant 0 : index
    %c0_30 = arith.constant 0 : index
    %52 = vector.load %arg12[%51, %c0_29, %c0_30] : memref<4x8x512xf32, #tpu.memory_space<vmem>>, vector<1x8x512xf32>
    %53 = vector.shape_cast %52 : vector<1x8x512xf32> to vector<8x512xf32>
    %c0_31 = arith.constant 0 : index
    %c0_32 = arith.constant 0 : index
    %54 = vector.load %arg9[%c0_31, %c0_32] : memref<8x128xf32, #tpu.memory_space<vmem>>, vector<8x128xf32>
    %c0_33 = arith.constant 0 : index
    %c0_34 = arith.constant 0 : index
    %55 = vector.load %arg4[%c0_33, %c0_34] : memref<128x512xf32, #tpu.memory_space<vmem>>, vector<128x512xf32>
    %cst_35 = arith.constant dense<0.000000e+00> : vector<8x512xf32>
    %56 = tpu.matmul %54, %55, %cst_35 {dimension_numbers = #tpu.dot_dimension_numbers<[1], [0], [0], [1], [0, 0, 1, 1], [], []>} : vector<8x128xf32>, vector<128x512xf32>, vector<8x512xf32> -> vector<8x512xf32>
    %57 = arith.addf %53, %56 : vector<8x512xf32>
    %58 = vector.extract_strided_slice %57 {offsets = [0, 0], sizes = [8, 128], strides = [1, 1]} : vector<8x512xf32> to vector<8x128xf32>
    %59 = arith.negf %58 : vector<8x128xf32>
    %60 = math.exp %59 : vector<8x128xf32>
    %cst_36 = arith.constant 1.000000e+00 : f32
    %61 = vector.broadcast %cst_36 : f32 to vector<8x128xf32>
    %62 = arith.addf %61, %60 : vector<8x128xf32>
    %63 = arith.divf %61, %62 : vector<8x128xf32>
    %64 = vector.extract_strided_slice %57 {offsets = [0, 128], sizes = [8, 128], strides = [1, 1]} : vector<8x512xf32> to vector<8x128xf32>
    %65 = arith.negf %64 : vector<8x128xf32>
    %66 = math.exp %65 : vector<8x128xf32>
    %cst_37 = arith.constant 1.000000e+00 : f32
    %67 = vector.broadcast %cst_37 : f32 to vector<8x128xf32>
    %68 = arith.addf %67, %66 : vector<8x128xf32>
    %69 = arith.divf %67, %68 : vector<8x128xf32>
    %70 = vector.extract_strided_slice %57 {offsets = [0, 256], sizes = [8, 128], strides = [1, 1]} : vector<8x512xf32> to vector<8x128xf32>
    %71 = math.tanh %70 : vector<8x128xf32>
    %72 = vector.extract_strided_slice %57 {offsets = [0, 384], sizes = [8, 128], strides = [1, 1]} : vector<8x512xf32> to vector<8x128xf32>
    %73 = arith.negf %72 : vector<8x128xf32>
    %74 = math.exp %73 : vector<8x128xf32>
    %cst_38 = arith.constant 1.000000e+00 : f32
    %75 = vector.broadcast %cst_38 : f32 to vector<8x128xf32>
    %76 = arith.addf %75, %74 : vector<8x128xf32>
    %77 = arith.divf %75, %76 : vector<8x128xf32>
    %c0_39 = arith.constant 0 : index
    %c0_40 = arith.constant 0 : index
    %78 = vector.load %arg10[%c0_39, %c0_40] : memref<8x128xf32, #tpu.memory_space<vmem>>, vector<8x128xf32>
    %79 = arith.mulf %69, %78 : vector<8x128xf32>
    %80 = arith.mulf %63, %71 : vector<8x128xf32>
    %81 = arith.addf %79, %80 : vector<8x128xf32>
    %82 = math.tanh %81 : vector<8x128xf32>
    %83 = arith.mulf %77, %82 : vector<8x128xf32>
    %c0_41 = arith.constant 0 : index
    %c0_42 = arith.constant 0 : index
    %84 = vector.load %arg10[%c0_41, %c0_42] : memref<8x128xf32, #tpu.memory_space<vmem>>, vector<8x128xf32>
    tpu.vector_store %arg10[%c0_41, %c0_42], %81 {strides = array<i32>} : memref<8x128xf32, #tpu.memory_space<vmem>>, vector<8x128xf32>,
    %c0_43 = arith.constant 0 : index
    %c0_44 = arith.constant 0 : index
    %85 = vector.load %arg9[%c0_43, %c0_44] : memref<8x128xf32, #tpu.memory_space<vmem>>, vector<8x128xf32>
    tpu.vector_store %arg9[%c0_43, %c0_44], %83 {strides = array<i32>} : memref<8x128xf32, #tpu.memory_space<vmem>>, vector<8x128xf32>,
    %86 = arith.index_cast %c1_i32 : i32 to index
    %c0_45 = arith.constant 0 : index
    %c0_46 = arith.constant 0 : index
    %87 = vector.load %arg11[%86, %c0_45, %c0_46] : memref<4x8x128xf32, #tpu.memory_space<vmem>>, vector<1x8x128xf32>
    %88 = vector.shape_cast %87 : vector<1x8x128xf32> to vector<8x128xf32>
    %89 = vector.shape_cast %83 : vector<8x128xf32> to vector<1x8x128xf32>
    tpu.vector_store %arg11[%86, %c0_45, %c0_46], %89 {strides = array<i32>} : memref<4x8x128xf32, #tpu.memory_space<vmem>>, vector<1x8x128xf32>,
    %c2_i32 = arith.constant 2 : i32
    %90 = arith.index_cast %c2_i32 : i32 to index
    %c0_47 = arith.constant 0 : index
    %c0_48 = arith.constant 0 : index
    %91 = vector.load %arg12[%90, %c0_47, %c0_48] : memref<4x8x512xf32, #tpu.memory_space<vmem>>, vector<1x8x512xf32>
    %92 = vector.shape_cast %91 : vector<1x8x512xf32> to vector<8x512xf32>
    %c0_49 = arith.constant 0 : index
    %c0_50 = arith.constant 0 : index
    %93 = vector.load %arg9[%c0_49, %c0_50] : memref<8x128xf32, #tpu.memory_space<vmem>>, vector<8x128xf32>
    %c0_51 = arith.constant 0 : index
    %c0_52 = arith.constant 0 : index
    %94 = vector.load %arg4[%c0_51, %c0_52] : memref<128x512xf32, #tpu.memory_space<vmem>>, vector<128x512xf32>
    %cst_53 = arith.constant dense<0.000000e+00> : vector<8x512xf32>
    %95 = tpu.matmul %93, %94, %cst_53 {dimension_numbers = #tpu.dot_dimension_numbers<[1], [0], [0], [1], [0, 0, 1, 1], [], []>} : vector<8x128xf32>, vector<128x512xf32>, vector<8x512xf32> -> vector<8x512xf32>
    %96 = arith.addf %92, %95 : vector<8x512xf32>
    %97 = vector.extract_strided_slice %96 {offsets = [0, 0], sizes = [8, 128], strides = [1, 1]} : vector<8x512xf32> to vector<8x128xf32>
    %98 = arith.negf %97 : vector<8x128xf32>
    %99 = math.exp %98 : vector<8x128xf32>
    %cst_54 = arith.constant 1.000000e+00 : f32
    %100 = vector.broadcast %cst_54 : f32 to vector<8x128xf32>
    %101 = arith.addf %100, %99 : vector<8x128xf32>
    %102 = arith.divf %100, %101 : vector<8x128xf32>
    %103 = vector.extract_strided_slice %96 {offsets = [0, 128], sizes = [8, 128], strides = [1, 1]} : vector<8x512xf32> to vector<8x128xf32>
    %104 = arith.negf %103 : vector<8x128xf32>
    %105 = math.exp %104 : vector<8x128xf32>
    %cst_55 = arith.constant 1.000000e+00 : f32
    %106 = vector.broadcast %cst_55 : f32 to vector<8x128xf32>
    %107 = arith.addf %106, %105 : vector<8x128xf32>
    %108 = arith.divf %106, %107 : vector<8x128xf32>
    %109 = vector.extract_strided_slice %96 {offsets = [0, 256], sizes = [8, 128], strides = [1, 1]} : vector<8x512xf32> to vector<8x128xf32>
    %110 = math.tanh %109 : vector<8x128xf32>
    %111 = vector.extract_strided_slice %96 {offsets = [0, 384], sizes = [8, 128], strides = [1, 1]} : vector<8x512xf32> to vector<8x128xf32>
    %112 = arith.negf %111 : vector<8x128xf32>
    %113 = math.exp %112 : vector<8x128xf32>
    %cst_56 = arith.constant 1.000000e+00 : f32
    %114 = vector.broadcast %cst_56 : f32 to vector<8x128xf32>
    %115 = arith.addf %114, %113 : vector<8x128xf32>
    %116 = arith.divf %114, %115 : vector<8x128xf32>
    %c0_57 = arith.constant 0 : index
    %c0_58 = arith.constant 0 : index
    %117 = vector.load %arg10[%c0_57, %c0_58] : memref<8x128xf32, #tpu.memory_space<vmem>>, vector<8x128xf32>
    %118 = arith.mulf %108, %117 : vector<8x128xf32>
    %119 = arith.mulf %102, %110 : vector<8x128xf32>
    %120 = arith.addf %118, %119 : vector<8x128xf32>
    %121 = math.tanh %120 : vector<8x128xf32>
    %122 = arith.mulf %116, %121 : vector<8x128xf32>
    %c0_59 = arith.constant 0 : index
    %c0_60 = arith.constant 0 : index
    %123 = vector.load %arg10[%c0_59, %c0_60] : memref<8x128xf32, #tpu.memory_space<vmem>>, vector<8x128xf32>
    tpu.vector_store %arg10[%c0_59, %c0_60], %120 {strides = array<i32>} : memref<8x128xf32, #tpu.memory_space<vmem>>, vector<8x128xf32>,
    %c0_61 = arith.constant 0 : index
    %c0_62 = arith.constant 0 : index
    %124 = vector.load %arg9[%c0_61, %c0_62] : memref<8x128xf32, #tpu.memory_space<vmem>>, vector<8x128xf32>
    tpu.vector_store %arg9[%c0_61, %c0_62], %122 {strides = array<i32>} : memref<8x128xf32, #tpu.memory_space<vmem>>, vector<8x128xf32>,
    %125 = arith.index_cast %c2_i32 : i32 to index
    %c0_63 = arith.constant 0 : index
    %c0_64 = arith.constant 0 : index
    %126 = vector.load %arg11[%125, %c0_63, %c0_64] : memref<4x8x128xf32, #tpu.memory_space<vmem>>, vector<1x8x128xf32>
    %127 = vector.shape_cast %126 : vector<1x8x128xf32> to vector<8x128xf32>
    %128 = vector.shape_cast %122 : vector<8x128xf32> to vector<1x8x128xf32>
    tpu.vector_store %arg11[%125, %c0_63, %c0_64], %128 {strides = array<i32>} : memref<4x8x128xf32, #tpu.memory_space<vmem>>, vector<1x8x128xf32>,
    %c3_i32 = arith.constant 3 : i32
    %129 = arith.index_cast %c3_i32 : i32 to index
    %c0_65 = arith.constant 0 : index
    %c0_66 = arith.constant 0 : index
    %130 = vector.load %arg12[%129, %c0_65, %c0_66] : memref<4x8x512xf32, #tpu.memory_space<vmem>>, vector<1x8x512xf32>
    %131 = vector.shape_cast %130 : vector<1x8x512xf32> to vector<8x512xf32>
    %c0_67 = arith.constant 0 : index
    %c0_68 = arith.constant 0 : index
    %132 = vector.load %arg9[%c0_67, %c0_68] : memref<8x128xf32, #tpu.memory_space<vmem>>, vector<8x128xf32>
    %c0_69 = arith.constant 0 : index
    %c0_70 = arith.constant 0 : index
    %133 = vector.load %arg4[%c0_69, %c0_70] : memref<128x512xf32, #tpu.memory_space<vmem>>, vector<128x512xf32>
    %cst_71 = arith.constant dense<0.000000e+00> : vector<8x512xf32>
    %134 = tpu.matmul %132, %133, %cst_71 {dimension_numbers = #tpu.dot_dimension_numbers<[1], [0], [0], [1], [0, 0, 1, 1], [], []>} : vector<8x128xf32>, vector<128x512xf32>, vector<8x512xf32> -> vector<8x512xf32>
    %135 = arith.addf %131, %134 : vector<8x512xf32>
    %136 = vector.extract_strided_slice %135 {offsets = [0, 0], sizes = [8, 128], strides = [1, 1]} : vector<8x512xf32> to vector<8x128xf32>
    %137 = arith.negf %136 : vector<8x128xf32>
    %138 = math.exp %137 : vector<8x128xf32>
    %cst_72 = arith.constant 1.000000e+00 : f32
    %139 = vector.broadcast %cst_72 : f32 to vector<8x128xf32>
    %140 = arith.addf %139, %138 : vector<8x128xf32>
    %141 = arith.divf %139, %140 : vector<8x128xf32>
    %142 = vector.extract_strided_slice %135 {offsets = [0, 128], sizes = [8, 128], strides = [1, 1]} : vector<8x512xf32> to vector<8x128xf32>
    %143 = arith.negf %142 : vector<8x128xf32>
    %144 = math.exp %143 : vector<8x128xf32>
    %cst_73 = arith.constant 1.000000e+00 : f32
    %145 = vector.broadcast %cst_73 : f32 to vector<8x128xf32>
    %146 = arith.addf %145, %144 : vector<8x128xf32>
    %147 = arith.divf %145, %146 : vector<8x128xf32>
    %148 = vector.extract_strided_slice %135 {offsets = [0, 256], sizes = [8, 128], strides = [1, 1]} : vector<8x512xf32> to vector<8x128xf32>
    %149 = math.tanh %148 : vector<8x128xf32>
    %150 = vector.extract_strided_slice %135 {offsets = [0, 384], sizes = [8, 128], strides = [1, 1]} : vector<8x512xf32> to vector<8x128xf32>
    %151 = arith.negf %150 : vector<8x128xf32>
    %152 = math.exp %151 : vector<8x128xf32>
    %cst_74 = arith.constant 1.000000e+00 : f32
    %153 = vector.broadcast %cst_74 : f32 to vector<8x128xf32>
    %154 = arith.addf %153, %152 : vector<8x128xf32>
    %155 = arith.divf %153, %154 : vector<8x128xf32>
    %c0_75 = arith.constant 0 : index
    %c0_76 = arith.constant 0 : index
    %156 = vector.load %arg10[%c0_75, %c0_76] : memref<8x128xf32, #tpu.memory_space<vmem>>, vector<8x128xf32>
    %157 = arith.mulf %147, %156 : vector<8x128xf32>
    %158 = arith.mulf %141, %149 : vector<8x128xf32>
    %159 = arith.addf %157, %158 : vector<8x128xf32>
    %160 = math.tanh %159 : vector<8x128xf32>
    %161 = arith.mulf %155, %160 : vector<8x128xf32>
    %c0_77 = arith.constant 0 : index
    %c0_78 = arith.constant 0 : index
    %162 = vector.load %arg10[%c0_77, %c0_78] : memref<8x128xf32, #tpu.memory_space<vmem>>, vector<8x128xf32>
    tpu.vector_store %arg10[%c0_77, %c0_78], %159 {strides = array<i32>} : memref<8x128xf32, #tpu.memory_space<vmem>>, vector<8x128xf32>,
    %c0_79 = arith.constant 0 : index
    %c0_80 = arith.constant 0 : index
    %163 = vector.load %arg9[%c0_79, %c0_80] : memref<8x128xf32, #tpu.memory_space<vmem>>, vector<8x128xf32>
    tpu.vector_store %arg9[%c0_79, %c0_80], %161 {strides = array<i32>} : memref<8x128xf32, #tpu.memory_space<vmem>>, vector<8x128xf32>,
    %164 = arith.index_cast %c3_i32 : i32 to index
    %c0_81 = arith.constant 0 : index
    %c0_82 = arith.constant 0 : index
    %165 = vector.load %arg11[%164, %c0_81, %c0_82] : memref<4x8x128xf32, #tpu.memory_space<vmem>>, vector<1x8x128xf32>
    %166 = vector.shape_cast %165 : vector<1x8x128xf32> to vector<8x128xf32>
    %167 = vector.shape_cast %161 : vector<8x128xf32> to vector<1x8x128xf32>
    tpu.vector_store %arg11[%164, %c0_81, %c0_82], %167 {strides = array<i32>} : memref<4x8x128xf32, #tpu.memory_space<vmem>>, vector<1x8x128xf32>,
    %c4_i32 = arith.constant 4 : i32
    %c0_83 = arith.constant 0 : index
    %c0_84 = arith.constant 0 : index
    %c0_85 = arith.constant 0 : index
    %168 = vector.load %arg11[%c0_83, %c0_84, %c0_85] : memref<4x8x128xf32, #tpu.memory_space<vmem>>, vector<4x8x128xf32>
    %169 = vector.shape_cast %168 : vector<4x8x128xf32> to vector<32x128xf32>
    %c0_86 = arith.constant 0 : index
    %c0_87 = arith.constant 0 : index
    %170 = vector.load %arg6[%c0_86, %c0_87] : memref<128x128xf32, #tpu.memory_space<vmem>>, vector<128x128xf32>
    %cst_88 = arith.constant dense<0.000000e+00> : vector<32x128xf32>
    %171 = tpu.matmul %169, %170, %cst_88 {dimension_numbers = #tpu.dot_dimension_numbers<[1], [0], [0], [1], [0, 0, 1, 1], [], []>} : vector<32x128xf32>, vector<128x128xf32>, vector<32x128xf32> -> vector<32x128xf32>
    %c0_89 = arith.constant 0 : index
    %c0_90 = arith.constant 0 : index
    %172 = vector.load %arg7[%c0_89, %c0_90] : memref<1x128xf32, #tpu.memory_space<vmem>>, vector<1x128xf32>
    %173 = vector.broadcast %172 : vector<1x128xf32> to vector<32x128xf32>
    %174 = arith.addf %171, %173 : vector<32x128xf32>
    %175 = vector.shape_cast %174 : vector<32x128xf32> to vector<4x8x128xf32>
    %c0_91 = arith.constant 0 : index
    %c0_92 = arith.constant 0 : index
    %c0_93 = arith.constant 0 : index
    %176 = vector.load %arg8[%c0_91, %c0_92, %c0_93] : memref<4x8x128xf32, #tpu.memory_space<vmem>>, vector<4x8x128xf32>
    tpu.vector_store %arg8[%c0_91, %c0_92, %c0_93], %175 {strides = array<i32>} : memref<4x8x128xf32, #tpu.memory_space<vmem>>, vector<4x8x128xf32>,
    return
  }
  func.func @transform_0(%arg0: i32, %arg1: i32) -> (i32, i32, i32) {
    %c0_i32 = arith.constant 0 : i32
    %c0_i32_0 = arith.constant 0 : i32
    return %arg1, %arg0, %c0_i32 : i32, i32, i32
  }
  func.func @transform_1(%arg0: i32, %arg1: i32) -> (i32, i32) {
    %c0_i32 = arith.constant 0 : i32
    %c0_i32_0 = arith.constant 0 : i32
    %c0_i32_1 = arith.constant 0 : i32
    return %c0_i32, %c0_i32_0 : i32, i32
  }
  func.func @transform_2(%arg0: i32, %arg1: i32) -> (i32, i32) {
    %c0_i32 = arith.constant 0 : i32
    %c0_i32_0 = arith.constant 0 : i32
    %c0_i32_1 = arith.constant 0 : i32
    return %c0_i32, %c0_i32_0 : i32, i32
  }
  func.func @transform_3(%arg0: i32, %arg1: i32) -> (i32, i32) {
    %c0_i32 = arith.constant 0 : i32
    %c0_i32_0 = arith.constant 0 : i32
    %c0_i32_1 = arith.constant 0 : i32
    return %c0_i32, %c0_i32_0 : i32, i32
  }
  func.func @transform_4(%arg0: i32, %arg1: i32) -> (i32, i32) {
    %c0_i32 = arith.constant 0 : i32
    %c0_i32_0 = arith.constant 0 : i32
    %c0_i32_1 = arith.constant 0 : i32
    return %c0_i32, %c0_i32_0 : i32, i32
  }
  func.func @transform_5(%arg0: i32, %arg1: i32) -> (i32, i32) {
    %c0_i32 = arith.constant 0 : i32
    %c0_i32_0 = arith.constant 0 : i32
    %c0_i32_1 = arith.constant 0 : i32
    return %c0_i32, %c0_i32_0 : i32, i32
  }
  func.func @transform_6(%arg0: i32, %arg1: i32) -> (i32, i32, i32) {
    %c0_i32 = arith.constant 0 : i32
    %c0_i32_0 = arith.constant 0 : i32
    return %arg1, %arg0, %c0_i32 : i32, i32, i32
  }
}

</mosaic_0001>

<llo_original>
// kernel: tpu_custom_call.1
$region0: #{tpu_custom_call.1}
  #allocation0 [shape = 'u32[]', space=smem, size = 0x4, offset = 0x4, fixed_abs, tag = 'smem constant byte address 0x4 - core index']
  #allocation1 [shape = 'u32[72,128]{1,0:T(1,128)}', space=vmem, size = 0x9000, scoped, tag = 'internal scratch']
  #allocation2 [shape = 'f32[8,128]{1,0:T(8,128)}', space=vmem, size = 0x1000, scoped, tag = 'scratch operand']
  #allocation3 [shape = 'f32[8,128]{1,0:T(8,128)}', space=vmem, size = 0x1000, scoped, tag = 'scratch operand']
  #allocation4 [shape = 'f32[4,8,128]{2,1,0:T(8,128)}', space=vmem, size = 0x4000, scoped, tag = 'scratch operand']
  #allocation5 [shape = 'f32[4,8,512]{2,1,0:T(8,128)}', space=vmem, size = 0x10000, scoped, tag = 'scratch operand']
  %s0 = inlined_call_operand.hbm [shape: f32[8,16,128], index: 0, kind: input, shape index: {}]
  %s1 = inlined_call_operand.hbm [shape: f32[128,512], index: 1, kind: input, shape index: {}]
  %s2 = inlined_call_operand.hbm [shape: f32[128,512], index: 2, kind: input, shape index: {}]
  %s3 = inlined_call_operand.hbm [shape: f32[1,512], index: 3, kind: input, shape index: {}]
  %s4 = inlined_call_operand.hbm [shape: f32[128,128], index: 4, kind: input, shape index: {}]
  %s5 = inlined_call_operand.vmem [shape: f32[1,128], index: 5, kind: input, shape index: {}]
  %s6 = inlined_call_operand.hbm [shape: f32[8,16,128], index: 6, kind: output, shape index: {}]
  %s7 = sld [smem:[#allocation0]]
  $region81: #{tpu_custom_call.1} parent=0
    _
  %s9 = ssub.s32 1, %s7
  %s10 = scalar_select 0, %s9, %s7
  $region1: #{tpu_custom_call.1} parent=0
    #allocation6 [shape = 'u8[32768]{0}', space=vmem, size = 0x8000, scoped, tag = 'input window, operand 0']
    #allocation7 [shape = 's32[2]{0}', space=sflag, size = 0x8, scoped, tag = 'scoped memory for tpu_custom_call.1']
    #allocation8 [shape = 's32[2]{0}', space=sflag, size = 0x8, scoped, tag = 'scoped memory for tpu_custom_call.1']
    #allocation9 [shape = 'u8[262144]{0}', space=vmem, size = 0x40000, scoped, tag = 'input window, operand 1, single buffered']
    #allocation10 [shape = 's32[1]{0}', space=sflag, size = 0x4, scoped, tag = 'scoped memory for tpu_custom_call.1']
    #allocation11 [shape = 'u8[262144]{0}', space=vmem, size = 0x40000, scoped, tag = 'input window, operand 2, single buffered']
    #allocation12 [shape = 'u8[2048]{0}', space=vmem, size = 0x800, scoped, tag = 'input window, operand 3, single buffered']
    #allocation13 [shape = 's32[1]{0}', space=sflag, size = 0x4, scoped, tag = 'scoped memory for tpu_custom_call.1']
    #allocation14 [shape = 'u8[65536]{0}', space=vmem, size = 0x10000, scoped, tag = 'input window, operand 4, single buffered']
    #allocation15 [shape = 'u8[32768]{0}', space=vmem, size = 0x8000, scoped, tag = 'output window, operand 0']
    %11 = vsyncpa [#allocation7], 0
    %s12 = scalar_lea.sflag [#allocation7], 1
    %13 = vsyncpa %s12, 0
    %14 = vsyncpa [#allocation10], 0
    %15 = vsyncpa [#allocation13], 0
    %16 = vsyncpa [#allocation8], 0
    %s17 = scalar_lea.sflag [#allocation8], 1
    %18 = vsyncpa %s17, 0
    loop: start=0, step=1, limit=6
    $region2: #{tpu_custom_call.1} parent=1 // loop_pre_header
      _
    $region3: #{tpu_custom_call.1} parent=1 // loop_header
      %s20 = sphi 0, %s24
      %p21 = scmp.ge.s32.totalorder %s20, 6
      %s27 = sphi 0, %s39
      %s28 = sphi 0, %s35
      %s29 = sphi 0, %s27
      %s30 = sphi 0, %s28
      %s31 = sphi 0, %s29
      %s32 = sphi 0, %s30
      %s44 = sphi 0, %s46
      %s47 = sphi 0, %s44
      %s48 = sphi 0, %s47
      %s64 = sphi 0, %s48
      %s68 = sphi 0, %s68
      %s70 = sphi 0, %s68
      %s71 = sphi 0, %s70
      %s85 = sphi 0, %s71
      %s89 = sphi 0, %s89
      %s91 = sphi 0, %s89
      %s92 = sphi 0, %s91
      %s106 = sphi 0, %s92
      %s110 = sphi 0, %s110
      %s112 = sphi 0, %s110
      %s113 = sphi 0, %s112
      %s127 = sphi 0, %s113
      %s131 = sphi 0, %s131
      %s133 = sphi 0, %s131
      %s134 = sphi 0, %s133
      %s148 = sphi 0, %s134
      %s152 = sphi 0, %s152
      %s154 = sphi 0, %s152
      %s155 = sphi 0, %s154
      %s169 = sphi 0, %s155
      %s177 = sphi 0, %s179
      %s180 = sphi 0, %s177
      %s181 = sphi 0, %s180
      %s197 = sphi 0, %s181
    $region4: #{tpu_custom_call.1} parent=1 // loop_header_branch
      %23 = sbr.rel (%p21) target = $region8
    $region5: #{tpu_custom_call.1} parent=1 // loop_body
      %s25 = ssub.s32 %s20, 1
      %s26 = ssub.s32 %s20, 2
      %s33 = sadd.s32 1, %s28
      %p34 = scmp.ge.s32.totalorder %s33, 2
      %s35 = scalar_select %p34, 0, %s33
      %s36 = sadd.s32 1, %s27
      %s37 = scalar_select %p34, %s36, %s27
      %p38 = scmp.ge.s32.totalorder %s37, 2
      %s39 = scalar_select %p38, 0, %s37
      %s40 = ssub.s32 %s28, %s35
      %s41 = ssub.s32 %s27, %s39
      %s42 = sor.u32 %s40, %s41
      %p43 = scmp.eq.s32.totalorder %s42, 0
      %s45 = sadd.s32 %s44, 1
      %s46 = scalar_select %p43, %s44, %s45
      %p49 = pneg %p43
      %p50 = scmp.eq.s32.totalorder %s20, 3
      %p51 = por %p49, %p50
      %p52 = scmp.ne.s32.totalorder %s44, %s47
      %p53 = scmp.eq.s32.totalorder %s20, 0
      %p54 = por %p52, %p53
      %p55 = scmp.ne.s32.totalorder %s44, %s47
      %p56 = scmp.eq.s32.totalorder %s25, 3
      %p57 = por %p55, %p56
      %p58 = scmp.ne.s32.totalorder %s47, %s48
      %p59 = scmp.eq.s32.totalorder %s25, 0
      %p60 = por %p58, %p59
      %p61 = scmp.ne.s32.totalorder %s47, %s48
      %p62 = scmp.eq.s32.totalorder %s26, 3
      %p63 = por %p61, %p62
      %p65 = scmp.ne.s32.totalorder %s48, %s64
      %p66 = scmp.eq.s32.totalorder %s26, 0
      %p67 = por %p65, %p66
      %s69 = sadd.s32 %s68, 1
      %p72 = scmp.eq.s32.totalorder %s20, 3
      %p73 = scmp.ne.s32.totalorder %s68, %s70
      %p74 = scmp.eq.s32.totalorder %s20, 0
      %p75 = por %p73, %p74
      %p76 = scmp.ne.s32.totalorder %s68, %s70
      %p77 = scmp.eq.s32.totalorder %s25, 3
      %p78 = por %p76, %p77
      %p79 = scmp.ne.s32.totalorder %s70, %s71
      %p80 = scmp.eq.s32.totalorder %s25, 0
      %p81 = por %p79, %p80
      %p82 = scmp.ne.s32.totalorder %s70, %s71
      %p83 = scmp.eq.s32.totalorder %s26, 3
      %p84 = por %p82, %p83
      %p86 = scmp.ne.s32.totalorder %s71, %s85
      %p87 = scmp.eq.s32.totalorder %s26, 0
      %p88 = por %p86, %p87
      %s90 = sadd.s32 %s89, 1
      %p93 = scmp.eq.s32.totalorder %s20, 3
      %p94 = scmp.ne.s32.totalorder %s89, %s91
      %p95 = scmp.eq.s32.totalorder %s20, 0
      %p96 = por %p94, %p95
      %p97 = scmp.ne.s32.totalorder %s89, %s91
      %p98 = scmp.eq.s32.totalorder %s25, 3
      %p99 = por %p97, %p98
      %p100 = scmp.ne.s32.totalorder %s91, %s92
      %p101 = scmp.eq.s32.totalorder %s25, 0
      %p102 = por %p100, %p101
      %p103 = scmp.ne.s32.totalorder %s91, %s92
      %p104 = scmp.eq.s32.totalorder %s26, 3
      %p105 = por %p103, %p104
      %p107 = scmp.ne.s32.totalorder %s92, %s106
      %p108 = scmp.eq.s32.totalorder %s26, 0
      %p109 = por %p107, %p108
      %s111 = sadd.s32 %s110, 1
      %p114 = scmp.eq.s32.totalorder %s20, 3
      %p115 = scmp.ne.s32.totalorder %s110, %s112
      %p116 = scmp.eq.s32.totalorder %s20, 0
      %p117 = por %p115, %p116
      %p118 = scmp.ne.s32.totalorder %s110, %s112
      %p119 = scmp.eq.s32.totalorder %s25, 3
      %p120 = por %p118, %p119
      %p121 = scmp.ne.s32.totalorder %s112, %s113
      %p122 = scmp.eq.s32.totalorder %s25, 0
      %p123 = por %p121, %p122
      %p124 = scmp.ne.s32.totalorder %s112, %s113
      %p125 = scmp.eq.s32.totalorder %s26, 3
      %p126 = por %p124, %p125
      %p128 = scmp.ne.s32.totalorder %s113, %s127
      %p129 = scmp.eq.s32.totalorder %s26, 0
      %p130 = por %p128, %p129
      %s132 = sadd.s32 %s131, 1
      %p135 = scmp.eq.s32.totalorder %s20, 3
      %p136 = scmp.ne.s32.totalorder %s131, %s133
      %p137 = scmp.eq.s32.totalorder %s20, 0
      %p138 = por %p136, %p137
      %p139 = scmp.ne.s32.totalorder %s131, %s133
      %p140 = scmp.eq.s32.totalorder %s25, 3
      %p141 = por %p139, %p140
      %p142 = scmp.ne.s32.totalorder %s133, %s134
      %p143 = scmp.eq.s32.totalorder %s25, 0
      %p144 = por %p142, %p143
      %p145 = scmp.ne.s32.totalorder %s133, %s134
      %p146 = scmp.eq.s32.totalorder %s26, 3
      %p147 = por %p145, %p146
      %p149 = scmp.ne.s32.totalorder %s134, %s148
      %p150 = scmp.eq.s32.totalorder %s26, 0
      %p151 = por %p149, %p150
      %s153 = sadd.s32 %s152, 1
      %p156 = scmp.eq.s32.totalorder %s20, 3
      %p157 = scmp.ne.s32.totalorder %s152, %s154
      %p158 = scmp.eq.s32.totalorder %s20, 0
      %p159 = por %p157, %p158
      %p160 = scmp.ne.s32.totalorder %s152, %s154
      %p161 = scmp.eq.s32.totalorder %s25, 3
      %p162 = por %p160, %p161
      %p163 = scmp.ne.s32.totalorder %s154, %s155
      %p164 = scmp.eq.s32.totalorder %s25, 0
      %p165 = por %p163, %p164
      %p166 = scmp.ne.s32.totalorder %s154, %s155
      %p167 = scmp.eq.s32.totalorder %s26, 3
      %p168 = por %p166, %p167
      %p170 = scmp.ne.s32.totalorder %s155, %s169
      %p171 = scmp.eq.s32.totalorder %s26, 0
      %p172 = por %p170, %p171
      %s173 = ssub.s32 %s28, %s35
      %s174 = ssub.s32 %s27, %s39
      %s175 = sor.u32 %s173, %s174
      %p176 = scmp.eq.s32.totalorder %s175, 0
      %s178 = sadd.s32 %s177, 1
      %s179 = scalar_select %p176, %s177, %s178
      %p182 = pneg %p176
      %p183 = scmp.eq.s32.totalorder %s20, 3
      %p184 = por %p182, %p183
      %p185 = scmp.ne.s32.totalorder %s177, %s180
      %p186 = scmp.eq.s32.totalorder %s20, 0
      %p187 = por %p185, %p186
      %p188 = scmp.ne.s32.totalorder %s177, %s180
      %p189 = scmp.eq.s32.totalorder %s25, 3
      %p190 = por %p188, %p189
      %p191 = scmp.ne.s32.totalorder %s180, %s181
      %p192 = scmp.eq.s32.totalorder %s25, 0
      %p193 = por %p191, %p192
      %p194 = scmp.ne.s32.totalorder %s180, %s181
      %p195 = scmp.eq.s32.totalorder %s26, 3
      %p196 = por %p194, %p195
      %p198 = scmp.ne.s32.totalorder %s181, %s197
      %p199 = scmp.eq.s32.totalorder %s26, 0
      %p200 = por %p198, %p199
      %p201 = scmp.le.s32.totalorder 1, %s20
      %p202 = scmp.lt.s32.totalorder %s20, 5
      %p203 = pnand %p201, %p202
      %p204 = pneg %p203
      // Predicated region
      $region9: #{tpu_custom_call.1} parent=5 // pred_check
        _
      $region10: #{tpu_custom_call.1} parent=5 // pred_check_branch
        %206 = sbr.rel (%p203) target = $region12
      $region11: #{tpu_custom_call.1} parent=5 // pred_region
        %s207 = ssub.s32 %s20, 1
        // Predicated region
        $region13: #{tpu_custom_call.1} parent=11 // pred_check
          %p208 = pneg %p81
        $region14: #{tpu_custom_call.1} parent=11 // pred_check_branch
          %210 = sbr.rel (%p208) target = $region16
        $region15: #{tpu_custom_call.1} parent=11 // pred_region
          %212 = vsyncadd [#allocation10], 0
          %s213 = sshll.u32 %s1, 4
          %s214 = int_to_ptr.hbm [resolvable:$true] %s213
          %s215 = sshll.u32 [#allocation9], 4
          %s216 = int_to_ptr.vmem [resolvable:$true] %s215
          %221 = dma.hbm_to_vmem [thread:$0]  %s214, 8192, %s216, [#allocation10], 512, 512, 32
        $region16: #{tpu_custom_call.1} parent=11 // pred_fallthru
          _
        // Predicated region
        $region17: #{tpu_custom_call.1} parent=11 // pred_check
          %p222 = pneg %p102
        $region18: #{tpu_custom_call.1} parent=11 // pred_check_branch
          %224 = sbr.rel (%p222) target = $region20
        $region19: #{tpu_custom_call.1} parent=11 // pred_region
          %226 = vsyncadd [#allocation10], 0
          %s227 = sshll.u32 %s2, 4
          %s228 = int_to_ptr.hbm [resolvable:$true] %s227
          %s229 = sshll.u32 [#allocation11], 4
          %s230 = int_to_ptr.vmem [resolvable:$true] %s229
          %235 = dma.hbm_to_vmem [thread:$0]  %s228, 8192, %s230, [#allocation10], 512, 512, 32
        $region20: #{tpu_custom_call.1} parent=11 // pred_fallthru
          _
        // Predicated region
        $region21: #{tpu_custom_call.1} parent=11 // pred_check
          %p236 = pneg %p123
        $region22: #{tpu_custom_call.1} parent=11 // pred_check_branch
          %238 = sbr.rel (%p236) target = $region24
        $region23: #{tpu_custom_call.1} parent=11 // pred_region
          %240 = vsyncadd [#allocation13], 0
          %s242 = sshll.u32 %s3, 4
          %s243 = int_to_ptr.hbm [resolvable:$true] %s242
          %s244 = sshll.u32 [#allocation12], 4
          %s245 = int_to_ptr.vmem [resolvable:$true] %s244
          %247 = dma.hbm_to_vmem [thread:$0]  %s243, 64, %s245, [#allocation13]
        $region24: #{tpu_custom_call.1} parent=11 // pred_fallthru
          _
        // Predicated region
        $region25: #{tpu_custom_call.1} parent=11 // pred_check
          %p248 = pneg %p144
        $region26: #{tpu_custom_call.1} parent=11 // pred_check_branch
          %250 = sbr.rel (%p248) target = $region28
        $region27: #{tpu_custom_call.1} parent=11 // pred_region
          %252 = vsyncadd [#allocation13], 0
          %s253 = sshll.u32 %s4, 4
          %s254 = int_to_ptr.hbm [resolvable:$true] %s253
          %s255 = sshll.u32 [#allocation14], 4
          %s256 = int_to_ptr.vmem [resolvable:$true] %s255
          %261 = dma.hbm_to_vmem [thread:$0]  %s254, 2048, %s256, [#allocation13], 128, 128, 8
        $region28: #{tpu_custom_call.1} parent=11 // pred_fallthru
          _
        // Predicated region
        $region29: #{tpu_custom_call.1} parent=11 // pred_check
          %p262 = pneg %p165
        $region30: #{tpu_custom_call.1} parent=11 // pred_check_branch
          %264 = sbr.rel (%p262) target = $region32
        $region31: #{tpu_custom_call.1} parent=11 // pred_region
          _
        $region32: #{tpu_custom_call.1} parent=11 // pred_fallthru
          _
      $region12: #{tpu_custom_call.1} parent=5 // pred_fallthru
        _
      %p265 = scmp.lt.s32.totalorder %s20, 4
      // Predicated region
      $region33: #{tpu_custom_call.1} parent=5 // pred_check
        %p266 = pneg %p265
      $region34: #{tpu_custom_call.1} parent=5 // pred_check_branch
        %268 = sbr.rel (%p266) target = $region36
      $region35: #{tpu_custom_call.1} parent=5 // pred_region
        // Predicated region
        $region37: #{tpu_custom_call.1} parent=35 // pred_check
          %p269 = pneg %p54
        $region38: #{tpu_custom_call.1} parent=35 // pred_check_branch
          %271 = sbr.rel (%p269) target = $region40
        $region39: #{tpu_custom_call.1} parent=35 // pred_region
          %s272 = sand.u32 %s44, 1
          %s273 = scalar_lea.sflag [#allocation7], %s272
          %s274 = sand.u32 %s44, 1
          %s275 = smul.addr %s274, 32
          %s276 = scalar_lea.vmem [#allocation6], %s275
          %s277 = smul.u32 4, %s28
          %279 = vsyncadd %s273, 0
          %s280 = smul.addr %s277, 2
          %s281 = sadd.s32 %s27, %s280
          %s282 = smul.addr %s281, 8
          %s283 = scalar_lea.hbm %s0, %s282
          %s284 = sshll.u32 %s283, 4
          %s285 = int_to_ptr.hbm [resolvable:$true] %s284
          %s286 = sshll.u32 %s276, 4
          %s287 = int_to_ptr.vmem [resolvable:$true] %s286
          %292 = dma.hbm_to_vmem [thread:$0]  %s285, 512, %s287, %s273, 256, 128, 8
        $region40: #{tpu_custom_call.1} parent=35 // pred_fallthru
          _
      $region36: #{tpu_custom_call.1} parent=5 // pred_fallthru
        _
      %p293 = scmp.le.s32.totalorder 1, %s20
      %p294 = scmp.lt.s32.totalorder %s20, 5
      %p295 = pnand %p293, %p294
      %p296 = pneg %p295
      // Predicated region
      $region41: #{tpu_custom_call.1} parent=5 // pred_check
        _
      $region42: #{tpu_custom_call.1} parent=5 // pred_check_branch
        %298 = sbr.rel (%p295) target = $region44
      $region43: #{tpu_custom_call.1} parent=5 // pred_region
        %s299 = ssub.s32 %s20, 1
        %s300 = sand.u32 %s47, 1
        %s301 = scalar_lea.sflag [#allocation7], %s300
        %s302 = sand.u32 %s47, 1
        %s303 = smul.addr %s302, 32
        %s304 = scalar_lea.vmem [#allocation6], %s303
        // Predicated region
        $region45: #{tpu_custom_call.1} parent=43 // pred_check
          %p305 = pneg %p60
        $region46: #{tpu_custom_call.1} parent=43 // pred_check_branch
          %307 = sbr.rel (%p305) target = $region48
        $region47: #{tpu_custom_call.1} parent=43 // pred_region
          %309 = dma.done %s301, 512
        $region48: #{tpu_custom_call.1} parent=43 // pred_fallthru
          _
        // Predicated region
        $region49: #{tpu_custom_call.1} parent=43 // pred_check
          %p310 = pneg %p81
        $region50: #{tpu_custom_call.1} parent=43 // pred_check_branch
          %312 = sbr.rel (%p310) target = $region52
        $region51: #{tpu_custom_call.1} parent=43 // pred_region
          %314 = dma.done [#allocation10], 8192
        $region52: #{tpu_custom_call.1} parent=43 // pred_fallthru
          _
        // Predicated region
        $region53: #{tpu_custom_call.1} parent=43 // pred_check
          %p315 = pneg %p102
        $region54: #{tpu_custom_call.1} parent=43 // pred_check_branch
          %317 = sbr.rel (%p315) target = $region56
        $region55: #{tpu_custom_call.1} parent=43 // pred_region
          %319 = dma.done [#allocation10], 8192
        $region56: #{tpu_custom_call.1} parent=43 // pred_fallthru
          _
        // Predicated region
        $region57: #{tpu_custom_call.1} parent=43 // pred_check
          %p320 = pneg %p123
        $region58: #{tpu_custom_call.1} parent=43 // pred_check_branch
          %322 = sbr.rel (%p320) target = $region60
        $region59: #{tpu_custom_call.1} parent=43 // pred_region
          %324 = dma.done [#allocation13], 64
        $region60: #{tpu_custom_call.1} parent=43 // pred_fallthru
          _
        // Predicated region
        $region61: #{tpu_custom_call.1} parent=43 // pred_check
          %p325 = pneg %p144
        $region62: #{tpu_custom_call.1} parent=43 // pred_check_branch
          %327 = sbr.rel (%p325) target = $region64
        $region63: #{tpu_custom_call.1} parent=43 // pred_region
          %329 = dma.done [#allocation13], 2048
        $region64: #{tpu_custom_call.1} parent=43 // pred_fallthru
          _
        %s330 = sand.u32 %s47, 1
        %s331 = scalar_lea.sflag [#allocation7], %s330
        %s332 = sand.u32 %s47, 1
        %s333 = smul.addr %s332, 32
        %s334 = scalar_lea.vmem [#allocation6], %s333
        %p335 = pneg %p60
        %p336 = pneg %p57
        %p337 = pneg %p81
        %p338 = pneg %p78
        %p339 = pneg %p102
        %p340 = pneg %p99
        %p341 = pneg %p123
        %p342 = pneg %p120
        %p343 = pneg %p144
        %p344 = pneg %p141
        %p345 = pneg %p165
        %p346 = pneg %p162
        %p347 = pneg %p193
        %p348 = pneg %p190
        %s349 = sand.u32 %s180, 1
        %s350 = scalar_lea.sflag [#allocation8], %s349
        %s351 = sand.u32 %s180, 1
        %s352 = smul.addr %s351, 32
        %s353 = scalar_lea.vmem [#allocation15], %s352
        %s354 = smul.u32 4, %s30
        %s355 = smul.u32 4, %s30
        %p356 = scmp.eq.s32.totalorder %s30, 0
        // Predicated region
        $region65: #{tpu_custom_call.1} parent=43 // pred_check
          %p357 = pneg %p356
        $region66: #{tpu_custom_call.1} parent=43 // pred_check_branch
          %359 = sbr.rel (%p357) target = $region68
        $region67: #{tpu_custom_call.1} parent=43 // pred_region
          %360 = vst [vmem:[#allocation2] sm:$0xff] 0.0
          %361 = vst [vmem:[#allocation3] sm:$0xff] 0.0
        $region68: #{tpu_custom_call.1} parent=43 // pred_fallthru
          _
        %v362 = vld [vmem:[%s304] sm:$0xff]
        %v363 = vld [vmem:[%s304 + $0x8] sm:$0xff]
        %v364 = vld [vmem:[%s304 + $0x10] sm:$0xff]
        %v365 = vld [vmem:[%s304 + $0x18] sm:$0xff]
        %v366 = vld [vmem:[#allocation9] sm:$0xff]
        %v367 = vld [vmem:[#allocation9 + $0x8] sm:$0xff]
        %v368 = vld [vmem:[#allocation9 + $0x10] sm:$0xff]
        %v369 = vld [vmem:[#allocation9 + $0x18] sm:$0xff]
        %v370 = vld [vmem:[#allocation9 + $0x20] sm:$0xff]
        %v371 = vld [vmem:[#allocation9 + $0x28] sm:$0xff]
        %v372 = vld [vmem:[#allocation9 + $0x30] sm:$0xff]
        %v373 = vld [vmem:[#allocation9 + $0x38] sm:$0xff]
        %v374 = vld [vmem:[#allocation9 + $0x40] sm:$0xff]
        %v375 = vld [vmem:[#allocation9 + $0x48] sm:$0xff]
        %v376 = vld [vmem:[#allocation9 + $0x50] sm:$0xff]
        %v377 = vld [vmem:[#allocation9 + $0x58] sm:$0xff]
        %v378 = vld [vmem:[#allocation9 + $0x60] sm:$0xff]
        %v379 = vld [vmem:[#allocation9 + $0x68] sm:$0xff]
        %v380 = vld [vmem:[#allocation9 + $0x70] sm:$0xff]
        %v381 = vld [vmem:[#allocation9 + $0x78] sm:$0xff]
        %v382 = vld [vmem:[#allocation9 + $0x80] sm:$0xff]
        %v383 = vld [vmem:[#allocation9 + $0x88] sm:$0xff]
        %v384 = vld [vmem:[#allocation9 + $0x90] sm:$0xff]
        %v385 = vld [vmem:[#allocation9 + $0x98] sm:$0xff]
        %v386 = vld [vmem:[#allocation9 + $0xa0] sm:$0xff]
        %v387 = vld [vmem:[#allocation9 + $0xa8] sm:$0xff]
        %v388 = vld [vmem:[#allocation9 + $0xb0] sm:$0xff]
        %v389 = vld [vmem:[#allocation9 + $0xb8] sm:$0xff]
        %v390 = vld [vmem:[#allocation9 + $0xc0] sm:$0xff]
        %v391 = vld [vmem:[#allocation9 + $0xc8] sm:$0xff]
        %v392 = vld [vmem:[#allocation9 + $0xd0] sm:$0xff]
        %v393 = vld [vmem:[#allocation9 + $0xd8] sm:$0xff]
        %v394 = vld [vmem:[#allocation9 + $0xe0] sm:$0xff]
        %v395 = vld [vmem:[#allocation9 + $0xe8] sm:$0xff]
        %v396 = vld [vmem:[#allocation9 + $0xf0] sm:$0xff]
        %v397 = vld [vmem:[#allocation9 + $0xf8] sm:$0xff]
        %v398 = vld [vmem:[#allocation9 + $0x100] sm:$0xff]
        %v399 = vld [vmem:[#allocation9 + $0x108] sm:$0xff]
        %v400 = vld [vmem:[#allocation9 + $0x110] sm:$0xff]
        %v401 = vld [vmem:[#allocation9 + $0x118] sm:$0xff]
        %v402 = vld [vmem:[#allocation9 + $0x120] sm:$0xff]
        %v403 = vld [vmem:[#allocation9 + $0x128] sm:$0xff]
        %v404 = vld [vmem:[#allocation9 + $0x130] sm:$0xff]
        %v405 = vld [vmem:[#allocation9 + $0x138] sm:$0xff]
        %v406 = vld [vmem:[#allocation9 + $0x140] sm:$0xff]
        %v407 = vld [vmem:[#allocation9 + $0x148] sm:$0xff]
        %v408 = vld [vmem:[#allocation9 + $0x150] sm:$0xff]
        %v409 = vld [vmem:[#allocation9 + $0x158] sm:$0xff]
        %v410 = vld [vmem:[#allocation9 + $0x160] sm:$0xff]
        %v411 = vld [vmem:[#allocation9 + $0x168] sm:$0xff]
        %v412 = vld [vmem:[#allocation9 + $0x170] sm:$0xff]
        %v413 = vld [vmem:[#allocation9 + $0x178] sm:$0xff]
        %v414 = vld [vmem:[#allocation9 + $0x180] sm:$0xff]
        %v415 = vld [vmem:[#allocation9 + $0x188] sm:$0xff]
        %v416 = vld [vmem:[#allocation9 + $0x190] sm:$0xff]
        %v417 = vld [vmem:[#allocation9 + $0x198] sm:$0xff]
        %v418 = vld [vmem:[#allocation9 + $0x1a0] sm:$0xff]
        %v419 = vld [vmem:[#allocation9 + $0x1a8] sm:$0xff]
        %v420 = vld [vmem:[#allocation9 + $0x1b0] sm:$0xff]
        %v421 = vld [vmem:[#allocation9 + $0x1b8] sm:$0xff]
        %v422 = vld [vmem:[#allocation9 + $0x1c0] sm:$0xff]
        %v423 = vld [vmem:[#allocation9 + $0x1c8] sm:$0xff]
        %v424 = vld [vmem:[#allocation9 + $0x1d0] sm:$0xff]
        %v425 = vld [vmem:[#allocation9 + $0x1d8] sm:$0xff]
        %v426 = vld [vmem:[#allocation9 + $0x1e0] sm:$0xff]
        %v427 = vld [vmem:[#allocation9 + $0x1e8] sm:$0xff]
        %v428 = vld [vmem:[#allocation9 + $0x1f0] sm:$0xff]
        %v429 = vld [vmem:[#allocation9 + $0x1f8] sm:$0xff]
        %v430 = vld [vmem:[#allocation12] sm:$0xf]
        %v432 = vperm.slane %v430, 0
        %v433 = vperm.slane %v430, 1
        %v434 = vperm.slane %v430, 2
        %v435 = vperm.slane %v430, 3
        %440 = vmatpush.msra.mxu0 %v426
        %441 = vmatpush.msra.mxu0 %v422
        %442 = vmatpush.msra.mxu0 %v418
        %443 = vmatpush.msra.mxu0 %v414
        %444 = vmatpush.msra.mxu0 %v410
        %445 = vmatpush.msra.mxu0 %v406
        %446 = vmatpush.msra.mxu0 %v402
        %447 = vmatpush.msra.mxu0 %v398
        %448 = vmatpush.msra.mxu0 %v394
        %449 = vmatpush.msra.mxu0 %v390
        %450 = vmatpush.msra.mxu0 %v386
        %451 = vmatpush.msra.mxu0 %v382
        %452 = vmatpush.msra.mxu0 %v378
        %453 = vmatpush.msra.mxu0 %v374
        %454 = vmatpush.msra.mxu0 %v370
        %455 = vmatpush.msra.mxu0 %v366
        %456 = vmatmul.f32.gmra.mxu0 %v362
        %v457 = vpop.f32.mrf.mxu0
        %v458 = vadd.f32 %v432, %v457
        %459 = vmatmul.f32.gmra.mxu0 %v363
        %v460 = vpop.f32.mrf.mxu0
        %v461 = vadd.f32 %v432, %v460
        %462 = vmatmul.f32.gmra.mxu0 %v364
        %v463 = vpop.f32.mrf.mxu0
        %v464 = vadd.f32 %v432, %v463
        %465 = vmatmul.f32.gmra.mxu0 %v365
        %v466 = vpop.f32.mrf.mxu0
        %v467 = vadd.f32 %v432, %v466
        %468 = vdwg.mxu0
        %469 = vmatpush.msra.mxu0 %v427
        %470 = vmatpush.msra.mxu0 %v423
        %471 = vmatpush.msra.mxu0 %v419
        %472 = vmatpush.msra.mxu0 %v415
        %473 = vmatpush.msra.mxu0 %v411
        %474 = vmatpush.msra.mxu0 %v407
        %475 = vmatpush.msra.mxu0 %v403
        %476 = vmatpush.msra.mxu0 %v399
        %477 = vmatpush.msra.mxu0 %v395
        %478 = vmatpush.msra.mxu0 %v391
        %479 = vmatpush.msra.mxu0 %v387
        %480 = vmatpush.msra.mxu0 %v383
        %481 = vmatpush.msra.mxu0 %v379
        %482 = vmatpush.msra.mxu0 %v375
        %483 = vmatpush.msra.mxu0 %v371
        %484 = vmatpush.msra.mxu0 %v367
        %485 = vmatmul.f32.gmra.mxu0 %v362
        %v486 = vpop.f32.mrf.mxu0
        %v487 = vadd.f32 %v433, %v486
        %488 = vmatmul.f32.gmra.mxu0 %v363
        %v489 = vpop.f32.mrf.mxu0
        %v490 = vadd.f32 %v433, %v489
        %491 = vmatmul.f32.gmra.mxu0 %v364
        %v492 = vpop.f32.mrf.mxu0
        %v493 = vadd.f32 %v433, %v492
        %494 = vmatmul.f32.gmra.mxu0 %v365
        %v495 = vpop.f32.mrf.mxu0
        %v496 = vadd.f32 %v433, %v495
        %497 = vdwg.mxu0
        %498 = vmatpush.msra.mxu0 %v428
        %499 = vmatpush.msra.mxu0 %v424
        %500 = vmatpush.msra.mxu0 %v420
        %501 = vmatpush.msra.mxu0 %v416
        %502 = vmatpush.msra.mxu0 %v412
        %503 = vmatpush.msra.mxu0 %v408
        %504 = vmatpush.msra.mxu0 %v404
        %505 = vmatpush.msra.mxu0 %v400
        %506 = vmatpush.msra.mxu0 %v396
        %507 = vmatpush.msra.mxu0 %v392
        %508 = vmatpush.msra.mxu0 %v388
        %509 = vmatpush.msra.mxu0 %v384
        %510 = vmatpush.msra.mxu0 %v380
        %511 = vmatpush.msra.mxu0 %v376
        %512 = vmatpush.msra.mxu0 %v372
        %513 = vmatpush.msra.mxu0 %v368
        %514 = vmatmul.f32.gmra.mxu0 %v362
        %v515 = vpop.f32.mrf.mxu0
        %v516 = vadd.f32 %v434, %v515
        %517 = vmatmul.f32.gmra.mxu0 %v363
        %v518 = vpop.f32.mrf.mxu0
        %v519 = vadd.f32 %v434, %v518
        %520 = vmatmul.f32.gmra.mxu0 %v364
        %v521 = vpop.f32.mrf.mxu0
        %v522 = vadd.f32 %v434, %v521
        %523 = vmatmul.f32.gmra.mxu0 %v365
        %v524 = vpop.f32.mrf.mxu0
        %v525 = vadd.f32 %v434, %v524
        %526 = vdwg.mxu0
        %527 = vmatpush.msra.mxu0 %v429
        %528 = vmatpush.msra.mxu0 %v425
        %529 = vmatpush.msra.mxu0 %v421
        %530 = vmatpush.msra.mxu0 %v417
        %531 = vmatpush.msra.mxu0 %v413
        %532 = vmatpush.msra.mxu0 %v409
        %533 = vmatpush.msra.mxu0 %v405
        %534 = vmatpush.msra.mxu0 %v401
        %535 = vmatpush.msra.mxu0 %v397
        %536 = vmatpush.msra.mxu0 %v393
        %537 = vmatpush.msra.mxu0 %v389
        %538 = vmatpush.msra.mxu0 %v385
        %539 = vmatpush.msra.mxu0 %v381
        %540 = vmatpush.msra.mxu0 %v377
        %541 = vmatpush.msra.mxu0 %v373
        %542 = vmatpush.msra.mxu0 %v369
        %543 = vmatmul.f32.gmra.mxu0 %v362
        %v544 = vpop.f32.mrf.mxu0
        %v545 = vadd.f32 %v435, %v544
        %546 = vmatmul.f32.gmra.mxu0 %v363
        %v547 = vpop.f32.mrf.mxu0
        %v548 = vadd.f32 %v435, %v547
        %549 = vmatmul.f32.gmra.mxu0 %v364
        %v550 = vpop.f32.mrf.mxu0
        %v551 = vadd.f32 %v435, %v550
        %552 = vmatmul.f32.gmra.mxu0 %v365
        %v553 = vpop.f32.mrf.mxu0
        %v554 = vadd.f32 %v435, %v553
        %555 = vdwg.mxu0
        %556 = vst [vmem:[#allocation5] sm:$0xff] %v458
        %557 = vst [vmem:[#allocation5 + $0x8] sm:$0xff] %v487
        %558 = vst [vmem:[#allocation5 + $0x10] sm:$0xff] %v516
        %559 = vst [vmem:[#allocation5 + $0x18] sm:$0xff] %v545
        %560 = vst [vmem:[#allocation5 + $0x20] sm:$0xff] %v461
        %561 = vst [vmem:[#allocation5 + $0x28] sm:$0xff] %v490
        %562 = vst [vmem:[#allocation5 + $0x30] sm:$0xff] %v519
        %563 = vst [vmem:[#allocation5 + $0x38] sm:$0xff] %v548
        %564 = vst [vmem:[#allocation5 + $0x40] sm:$0xff] %v464
        %565 = vst [vmem:[#allocation5 + $0x48] sm:$0xff] %v493
        %566 = vst [vmem:[#allocation5 + $0x50] sm:$0xff] %v522
        %567 = vst [vmem:[#allocation5 + $0x58] sm:$0xff] %v551
        %568 = vst [vmem:[#allocation5 + $0x60] sm:$0xff] %v467
        %569 = vst [vmem:[#allocation5 + $0x68] sm:$0xff] %v496
        %570 = vst [vmem:[#allocation5 + $0x70] sm:$0xff] %v525
        %571 = vst [vmem:[#allocation5 + $0x78] sm:$0xff] %v554
        %v572 = vld [vmem:[#allocation5] sm:$0xff]
        %v573 = vld [vmem:[#allocation5 + $0x8] sm:$0xff]
        %v574 = vld [vmem:[#allocation5 + $0x10] sm:$0xff]
        %v575 = vld [vmem:[#allocation5 + $0x18] sm:$0xff]
        %v576 = vld [vmem:[#allocation2] sm:$0xff]
        %v577 = vld [vmem:[#allocation11] sm:$0xff]
        %v578 = vld [vmem:[#allocation11 + $0x8] sm:$0xff]
        %v579 = vld [vmem:[#allocation11 + $0x10] sm:$0xff]
        %v580 = vld [vmem:[#allocation11 + $0x18] sm:$0xff]
        %v581 = vld [vmem:[#allocation11 + $0x20] sm:$0xff]
        %v582 = vld [vmem:[#allocation11 + $0x28] sm:$0xff]
        %v583 = vld [vmem:[#allocation11 + $0x30] sm:$0xff]
        %v584 = vld [vmem:[#allocation11 + $0x38] sm:$0xff]
        %v585 = vld [vmem:[#allocation11 + $0x40] sm:$0xff]
        %v586 = vld [vmem:[#allocation11 + $0x48] sm:$0xff]
        %v587 = vld [vmem:[#allocation11 + $0x50] sm:$0xff]
        %v588 = vld [vmem:[#allocation11 + $0x58] sm:$0xff]
        %v589 = vld [vmem:[#allocation11 + $0x60] sm:$0xff]
        %v590 = vld [vmem:[#allocation11 + $0x68] sm:$0xff]
        %v591 = vld [vmem:[#allocation11 + $0x70] sm:$0xff]
        %v592 = vld [vmem:[#allocation11 + $0x78] sm:$0xff]
        %v593 = vld [vmem:[#allocation11 + $0x80] sm:$0xff]
        %v594 = vld [vmem:[#allocation11 + $0x88] sm:$0xff]
        %v595 = vld [vmem:[#allocation11 + $0x90] sm:$0xff]
        %v596 = vld [vmem:[#allocation11 + $0x98] sm:$0xff]
        %v597 = vld [vmem:[#allocation11 + $0xa0] sm:$0xff]
        %v598 = vld [vmem:[#allocation11 + $0xa8] sm:$0xff]
        %v599 = vld [vmem:[#allocation11 + $0xb0] sm:$0xff]
        %v600 = vld [vmem:[#allocation11 + $0xb8] sm:$0xff]
        %v601 = vld [vmem:[#allocation11 + $0xc0] sm:$0xff]
        %v602 = vld [vmem:[#allocation11 + $0xc8] sm:$0xff]
        %v603 = vld [vmem:[#allocation11 + $0xd0] sm:$0xff]
        %v604 = vld [vmem:[#allocation11 + $0xd8] sm:$0xff]
        %v605 = vld [vmem:[#allocation11 + $0xe0] sm:$0xff]
        %v606 = vld [vmem:[#allocation11 + $0xe8] sm:$0xff]
        %v607 = vld [vmem:[#allocation11 + $0xf0] sm:$0xff]
        %v608 = vld [vmem:[#allocation11 + $0xf8] sm:$0xff]
        %v609 = vld [vmem:[#allocation11 + $0x100] sm:$0xff]
        %v610 = vld [vmem:[#allocation11 + $0x108] sm:$0xff]
        %v611 = vld [vmem:[#allocation11 + $0x110] sm:$0xff]
        %v612 = vld [vmem:[#allocation11 + $0x118] sm:$0xff]
        %v613 = vld [vmem:[#allocation11 + $0x120] sm:$0xff]
        %v614 = vld [vmem:[#allocation11 + $0x128] sm:$0xff]
        %v615 = vld [vmem:[#allocation11 + $0x130] sm:$0xff]
        %v616 = vld [vmem:[#allocation11 + $0x138] sm:$0xff]
        %v617 = vld [vmem:[#allocation11 + $0x140] sm:$0xff]
        %v618 = vld [vmem:[#allocation11 + $0x148] sm:$0xff]
        %v619 = vld [vmem:[#allocation11 + $0x150] sm:$0xff]
        %v620 = vld [vmem:[#allocation11 + $0x158] sm:$0xff]
        %v621 = vld [vmem:[#allocation11 + $0x160] sm:$0xff]
        %v622 = vld [vmem:[#allocation11 + $0x168] sm:$0xff]
        %v623 = vld [vmem:[#allocation11 + $0x170] sm:$0xff]
        %v624 = vld [vmem:[#allocation11 + $0x178] sm:$0xff]
        %v625 = vld [vmem:[#allocation11 + $0x180] sm:$0xff]
        %v626 = vld [vmem:[#allocation11 + $0x188] sm:$0xff]
        %v627 = vld [vmem:[#allocation11 + $0x190] sm:$0xff]
        %v628 = vld [vmem:[#allocation11 + $0x198] sm:$0xff]
        %v629 = vld [vmem:[#allocation11 + $0x1a0] sm:$0xff]
        %v630 = vld [vmem:[#allocation11 + $0x1a8] sm:$0xff]
        %v631 = vld [vmem:[#allocation11 + $0x1b0] sm:$0xff]
        %v632 = vld [vmem:[#allocation11 + $0x1b8] sm:$0xff]
        %v633 = vld [vmem:[#allocation11 + $0x1c0] sm:$0xff]
        %v634 = vld [vmem:[#allocation11 + $0x1c8] sm:$0xff]
        %v635 = vld [vmem:[#allocation11 + $0x1d0] sm:$0xff]
        %v636 = vld [vmem:[#allocation11 + $0x1d8] sm:$0xff]
        %v637 = vld [vmem:[#allocation11 + $0x1e0] sm:$0xff]
        %v638 = vld [vmem:[#allocation11 + $0x1e8] sm:$0xff]
        %v639 = vld [vmem:[#allocation11 + $0x1f0] sm:$0xff]
        %v640 = vld [vmem:[#allocation11 + $0x1f8] sm:$0xff]
        %641 = vmatpush.msra.mxu0 %v637
        %642 = vmatpush.msra.mxu0 %v633
        %643 = vmatpush.msra.mxu0 %v629
        %644 = vmatpush.msra.mxu0 %v625
        %645 = vmatpush.msra.mxu0 %v621
        %646 = vmatpush.msra.mxu0 %v617
        %647 = vmatpush.msra.mxu0 %v613
        %648 = vmatpush.msra.mxu0 %v609
        %649 = vmatpush.msra.mxu0 %v605
        %650 = vmatpush.msra.mxu0 %v601
        %651 = vmatpush.msra.mxu0 %v597
        %652 = vmatpush.msra.mxu0 %v593
        %653 = vmatpush.msra.mxu0 %v589
        %654 = vmatpush.msra.mxu0 %v585
        %655 = vmatpush.msra.mxu0 %v581
        %656 = vmatpush.msra.mxu0 %v577
        %657 = vmatmul.f32.gmra.mxu0 %v576
        %v658 = vpop.f32.mrf.mxu0
        %v659 = vadd.f32 0.0, %v658
        %660 = vdwg.mxu0
        %661 = vmatpush.msra.mxu0 %v638
        %662 = vmatpush.msra.mxu0 %v634
        %663 = vmatpush.msra.mxu0 %v630
        %664 = vmatpush.msra.mxu0 %v626
        %665 = vmatpush.msra.mxu0 %v622
        %666 = vmatpush.msra.mxu0 %v618
        %667 = vmatpush.msra.mxu0 %v614
        %668 = vmatpush.msra.mxu0 %v610
        %669 = vmatpush.msra.mxu0 %v606
        %670 = vmatpush.msra.mxu0 %v602
        %671 = vmatpush.msra.mxu0 %v598
        %672 = vmatpush.msra.mxu0 %v594
        %673 = vmatpush.msra.mxu0 %v590
        %674 = vmatpush.msra.mxu0 %v586
        %675 = vmatpush.msra.mxu0 %v582
        %676 = vmatpush.msra.mxu0 %v578
        %677 = vmatmul.f32.gmra.mxu0 %v576
        %v678 = vpop.f32.mrf.mxu0
        %v679 = vadd.f32 0.0, %v678
        %680 = vdwg.mxu0
        %681 = vmatpush.msra.mxu0 %v639
        %682 = vmatpush.msra.mxu0 %v635
        %683 = vmatpush.msra.mxu0 %v631
        %684 = vmatpush.msra.mxu0 %v627
        %685 = vmatpush.msra.mxu0 %v623
        %686 = vmatpush.msra.mxu0 %v619
        %687 = vmatpush.msra.mxu0 %v615
        %688 = vmatpush.msra.mxu0 %v611
        %689 = vmatpush.msra.mxu0 %v607
        %690 = vmatpush.msra.mxu0 %v603
        %691 = vmatpush.msra.mxu0 %v599
        %692 = vmatpush.msra.mxu0 %v595
        %693 = vmatpush.msra.mxu0 %v591
        %694 = vmatpush.msra.mxu0 %v587
        %695 = vmatpush.msra.mxu0 %v583
        %696 = vmatpush.msra.mxu0 %v579
        %697 = vmatmul.f32.gmra.mxu0 %v576
        %v698 = vpop.f32.mrf.mxu0
        %v699 = vadd.f32 0.0, %v698
        %700 = vdwg.mxu0
        %701 = vmatpush.msra.mxu0 %v640
        %702 = vmatpush.msra.mxu0 %v636
        %703 = vmatpush.msra.mxu0 %v632
        %704 = vmatpush.msra.mxu0 %v628
        %705 = vmatpush.msra.mxu0 %v624
        %706 = vmatpush.msra.mxu0 %v620
        %707 = vmatpush.msra.mxu0 %v616
        %708 = vmatpush.msra.mxu0 %v612
        %709 = vmatpush.msra.mxu0 %v608
        %710 = vmatpush.msra.mxu0 %v604
        %711 = vmatpush.msra.mxu0 %v600
        %712 = vmatpush.msra.mxu0 %v596
        %713 = vmatpush.msra.mxu0 %v592
        %714 = vmatpush.msra.mxu0 %v588
        %715 = vmatpush.msra.mxu0 %v584
        %716 = vmatpush.msra.mxu0 %v580
        %717 = vmatmul.f32.gmra.mxu0 %v576
        %v718 = vpop.f32.mrf.mxu0
        %v719 = vadd.f32 0.0, %v718
        %720 = vdwg.mxu0
        %v721 = vadd.f32 %v572, %v659
        %v722 = vadd.f32 %v573, %v679
        %v723 = vadd.f32 %v574, %v699
        %v724 = vadd.f32 %v575, %v719
        %v725 = vxor.u32 %v721, 2147483648
        %v726 = vmul.f32 %v725, 1.442695
        %v727 = vpow.pop %v726
        %v728 = vadd.f32 %v727, 1.0
        %v729 = vrcp.pop %v728
        %v730 = vmul.f32 %v728, %v729
        %v731 = vsub.f32 1.0, %v730
        %v732 = vmul.f32 %v729, %v731
        %v733 = vadd.f32 %v729, %v732
        %vm734 = vweird.f32 %v728
        %vm735 = vweird.f32 %v729
        %vm736 = vmor %vm734, %vm735
        %v737 = vsel %vm736, %v729, %v733
        %v738 = vand.u32 2147483647, %v728
        %vm739 = vcmp.eq.f32.partialorder %v738, 8.507059e+37
        %v740 = vand.u32 %v728, 2147483648
        %v741 = vor.u32 1.1754944e-38, %v740
        %v742 = vsel %vm739, %v741, %v737
        %v743 = vmul.f32 1.0, %v742
        %v744 = vxor.u32 %v722, 2147483648
        %v745 = vmul.f32 %v744, 1.442695
        %v746 = vpow.pop %v745
        %v747 = vadd.f32 %v746, 1.0
        %v748 = vrcp.pop %v747
        %v749 = vmul.f32 %v747, %v748
        %v750 = vsub.f32 1.0, %v749
        %v751 = vmul.f32 %v748, %v750
        %v752 = vadd.f32 %v748, %v751
        %vm753 = vweird.f32 %v747
        %vm754 = vweird.f32 %v748
        %vm755 = vmor %vm753, %vm754
        %v756 = vsel %vm755, %v748, %v752
        %v757 = vand.u32 2147483647, %v747
        %vm758 = vcmp.eq.f32.partialorder %v757, 8.507059e+37
        %v759 = vand.u32 %v747, 2147483648
        %v760 = vor.u32 1.1754944e-38, %v759
        %v761 = vsel %vm758, %v760, %v756
        %v762 = vmul.f32 1.0, %v761
        %v763 = vtanh.pop %v723
        %v764 = vxor.u32 %v724, 2147483648
        %v765 = vmul.f32 %v764, 1.442695
        %v766 = vpow.pop %v765
        %v767 = vadd.f32 %v766, 1.0
        %v768 = vrcp.pop %v767
        %v769 = vmul.f32 %v767, %v768
        %v770 = vsub.f32 1.0, %v769
        %v771 = vmul.f32 %v768, %v770
        %v772 = vadd.f32 %v768, %v771
        %vm773 = vweird.f32 %v767
        %vm774 = vweird.f32 %v768
        %vm775 = vmor %vm773, %vm774
        %v776 = vsel %vm775, %v768, %v772
        %v777 = vand.u32 2147483647, %v767
        %vm778 = vcmp.eq.f32.partialorder %v777, 8.507059e+37
        %v779 = vand.u32 %v767, 2147483648
        %v780 = vor.u32 1.1754944e-38, %v779
        %v781 = vsel %vm778, %v780, %v776
        %v782 = vmul.f32 1.0, %v781
        %v783 = vld [vmem:[#allocation3] sm:$0xff]
        %v784 = vmul.f32 %v762, %v783
        %v785 = vmul.f32 %v743, %v763
        %v786 = vadd.f32 %v784, %v785
        %v787 = vtanh.pop %v786
        %v788 = vmul.f32 %v782, %v787
        %789 = vst [vmem:[#allocation3] sm:$0xff] %v786
        %790 = vst [vmem:[#allocation2] sm:$0xff] %v788
        %791 = vst [vmem:[#allocation4] sm:$0xff] %v788
        %s792 = scalar_lea.vmem [#allocation5], 32
        %v793 = vld [vmem:[%s792] sm:$0xff]
        %v794 = vld [vmem:[%s792 + $0x8] sm:$0xff]
        %v795 = vld [vmem:[%s792 + $0x10] sm:$0xff]
        %v796 = vld [vmem:[%s792 + $0x18] sm:$0xff]
        %v797 = vld [vmem:[#allocation2] sm:$0xff]
        %v798 = vld [vmem:[#allocation11] sm:$0xff]
        %v799 = vld [vmem:[#allocation11 + $0x8] sm:$0xff]
        %v800 = vld [vmem:[#allocation11 + $0x10] sm:$0xff]
        %v801 = vld [vmem:[#allocation11 + $0x18] sm:$0xff]
        %v802 = vld [vmem:[#allocation11 + $0x20] sm:$0xff]
        %v803 = vld [vmem:[#allocation11 + $0x28] sm:$0xff]
        %v804 = vld [vmem:[#allocation11 + $0x30] sm:$0xff]
        %v805 = vld [vmem:[#allocation11 + $0x38] sm:$0xff]
        %v806 = vld [vmem:[#allocation11 + $0x40] sm:$0xff]
        %v807 = vld [vmem:[#allocation11 + $0x48] sm:$0xff]
        %v808 = vld [vmem:[#allocation11 + $0x50] sm:$0xff]
        %v809 = vld [vmem:[#allocation11 + $0x58] sm:$0xff]
        %v810 = vld [vmem:[#allocation11 + $0x60] sm:$0xff]
        %v811 = vld [vmem:[#allocation11 + $0x68] sm:$0xff]
        %v812 = vld [vmem:[#allocation11 + $0x70] sm:$0xff]
        %v813 = vld [vmem:[#allocation11 + $0x78] sm:$0xff]
        %v814 = vld [vmem:[#allocation11 + $0x80] sm:$0xff]
        %v815 = vld [vmem:[#allocation11 + $0x88] sm:$0xff]
        %v816 = vld [vmem:[#allocation11 + $0x90] sm:$0xff]
        %v817 = vld [vmem:[#allocation11 + $0x98] sm:$0xff]
        %v818 = vld [vmem:[#allocation11 + $0xa0] sm:$0xff]
        %v819 = vld [vmem:[#allocation11 + $0xa8] sm:$0xff]
        %v820 = vld [vmem:[#allocation11 + $0xb0] sm:$0xff]
        %v821 = vld [vmem:[#allocation11 + $0xb8] sm:$0xff]
        %v822 = vld [vmem:[#allocation11 + $0xc0] sm:$0xff]
        %v823 = vld [vmem:[#allocation11 + $0xc8] sm:$0xff]
        %v824 = vld [vmem:[#allocation11 + $0xd0] sm:$0xff]
        %v825 = vld [vmem:[#allocation11 + $0xd8] sm:$0xff]
        %v826 = vld [vmem:[#allocation11 + $0xe0] sm:$0xff]
        %v827 = vld [vmem:[#allocation11 + $0xe8] sm:$0xff]
        %v828 = vld [vmem:[#allocation11 + $0xf0] sm:$0xff]
        %v829 = vld [vmem:[#allocation11 + $0xf8] sm:$0xff]
        %v830 = vld [vmem:[#allocation11 + $0x100] sm:$0xff]
        %v831 = vld [vmem:[#allocation11 + $0x108] sm:$0xff]
        %v832 = vld [vmem:[#allocation11 + $0x110] sm:$0xff]
        %v833 = vld [vmem:[#allocation11 + $0x118] sm:$0xff]
        %v834 = vld [vmem:[#allocation11 + $0x120] sm:$0xff]
        %v835 = vld [vmem:[#allocation11 + $0x128] sm:$0xff]
        %v836 = vld [vmem:[#allocation11 + $0x130] sm:$0xff]
        %v837 = vld [vmem:[#allocation11 + $0x138] sm:$0xff]
        %v838 = vld [vmem:[#allocation11 + $0x140] sm:$0xff]
        %v839 = vld [vmem:[#allocation11 + $0x148] sm:$0xff]
        %v840 = vld [vmem:[#allocation11 + $0x150] sm:$0xff]
        %v841 = vld [vmem:[#allocation11 + $0x158] sm:$0xff]
        %v842 = vld [vmem:[#allocation11 + $0x160] sm:$0xff]
        %v843 = vld [vmem:[#allocation11 + $0x168] sm:$0xff]
        %v844 = vld [vmem:[#allocation11 + $0x170] sm:$0xff]
        %v845 = vld [vmem:[#allocation11 + $0x178] sm:$0xff]
        %v846 = vld [vmem:[#allocation11 + $0x180] sm:$0xff]
        %v847 = vld [vmem:[#allocation11 + $0x188] sm:$0xff]
        %v848 = vld [vmem:[#allocation11 + $0x190] sm:$0xff]
        %v849 = vld [vmem:[#allocation11 + $0x198] sm:$0xff]
        %v850 = vld [vmem:[#allocation11 + $0x1a0] sm:$0xff]
        %v851 = vld [vmem:[#allocation11 + $0x1a8] sm:$0xff]
        %v852 = vld [vmem:[#allocation11 + $0x1b0] sm:$0xff]
        %v853 = vld [vmem:[#allocation11 + $0x1b8] sm:$0xff]
        %v854 = vld [vmem:[#allocation11 + $0x1c0] sm:$0xff]
        %v855 = vld [vmem:[#allocation11 + $0x1c8] sm:$0xff]
        %v856 = vld [vmem:[#allocation11 + $0x1d0] sm:$0xff]
        %v857 = vld [vmem:[#allocation11 + $0x1d8] sm:$0xff]
        %v858 = vld [vmem:[#allocation11 + $0x1e0] sm:$0xff]
        %v859 = vld [vmem:[#allocation11 + $0x1e8] sm:$0xff]
        %v860 = vld [vmem:[#allocation11 + $0x1f0] sm:$0xff]
        %v861 = vld [vmem:[#allocation11 + $0x1f8] sm:$0xff]
        %862 = vmatpush.msra.mxu0 %v858
        %863 = vmatpush.msra.mxu0 %v854
        %864 = vmatpush.msra.mxu0 %v850
        %865 = vmatpush.msra.mxu0 %v846
        %866 = vmatpush.msra.mxu0 %v842
        %867 = vmatpush.msra.mxu0 %v838
        %868 = vmatpush.msra.mxu0 %v834
        %869 = vmatpush.msra.mxu0 %v830
        %870 = vmatpush.msra.mxu0 %v826
        %871 = vmatpush.msra.mxu0 %v822
        %872 = vmatpush.msra.mxu0 %v818
        %873 = vmatpush.msra.mxu0 %v814
        %874 = vmatpush.msra.mxu0 %v810
        %875 = vmatpush.msra.mxu0 %v806
        %876 = vmatpush.msra.mxu0 %v802
        %877 = vmatpush.msra.mxu0 %v798
        %878 = vmatmul.f32.gmra.mxu0 %v797
        %v879 = vpop.f32.mrf.mxu0
        %v880 = vadd.f32 0.0, %v879
        %881 = vdwg.mxu0
        %882 = vmatpush.msra.mxu0 %v859
        %883 = vmatpush.msra.mxu0 %v855
        %884 = vmatpush.msra.mxu0 %v851
        %885 = vmatpush.msra.mxu0 %v847
        %886 = vmatpush.msra.mxu0 %v843
        %887 = vmatpush.msra.mxu0 %v839
        %888 = vmatpush.msra.mxu0 %v835
        %889 = vmatpush.msra.mxu0 %v831
        %890 = vmatpush.msra.mxu0 %v827
        %891 = vmatpush.msra.mxu0 %v823
        %892 = vmatpush.msra.mxu0 %v819
        %893 = vmatpush.msra.mxu0 %v815
        %894 = vmatpush.msra.mxu0 %v811
        %895 = vmatpush.msra.mxu0 %v807
        %896 = vmatpush.msra.mxu0 %v803
        %897 = vmatpush.msra.mxu0 %v799
        %898 = vmatmul.f32.gmra.mxu0 %v797
        %v899 = vpop.f32.mrf.mxu0
        %v900 = vadd.f32 0.0, %v899
        %901 = vdwg.mxu0
        %902 = vmatpush.msra.mxu0 %v860
        %903 = vmatpush.msra.mxu0 %v856
        %904 = vmatpush.msra.mxu0 %v852
        %905 = vmatpush.msra.mxu0 %v848
        %906 = vmatpush.msra.mxu0 %v844
        %907 = vmatpush.msra.mxu0 %v840
        %908 = vmatpush.msra.mxu0 %v836
        %909 = vmatpush.msra.mxu0 %v832
        %910 = vmatpush.msra.mxu0 %v828
        %911 = vmatpush.msra.mxu0 %v824
        %912 = vmatpush.msra.mxu0 %v820
        %913 = vmatpush.msra.mxu0 %v816
        %914 = vmatpush.msra.mxu0 %v812
        %915 = vmatpush.msra.mxu0 %v808
        %916 = vmatpush.msra.mxu0 %v804
        %917 = vmatpush.msra.mxu0 %v800
        %918 = vmatmul.f32.gmra.mxu0 %v797
        %v919 = vpop.f32.mrf.mxu0
        %v920 = vadd.f32 0.0, %v919
        %921 = vdwg.mxu0
        %922 = vmatpush.msra.mxu0 %v861
        %923 = vmatpush.msra.mxu0 %v857
        %924 = vmatpush.msra.mxu0 %v853
        %925 = vmatpush.msra.mxu0 %v849
        %926 = vmatpush.msra.mxu0 %v845
        %927 = vmatpush.msra.mxu0 %v841
        %928 = vmatpush.msra.mxu0 %v837
        %929 = vmatpush.msra.mxu0 %v833
        %930 = vmatpush.msra.mxu0 %v829
        %931 = vmatpush.msra.mxu0 %v825
        %932 = vmatpush.msra.mxu0 %v821
        %933 = vmatpush.msra.mxu0 %v817
        %934 = vmatpush.msra.mxu0 %v813
        %935 = vmatpush.msra.mxu0 %v809
        %936 = vmatpush.msra.mxu0 %v805
        %937 = vmatpush.msra.mxu0 %v801
        %938 = vmatmul.f32.gmra.mxu0 %v797
        %v939 = vpop.f32.mrf.mxu0
        %v940 = vadd.f32 0.0, %v939
        %941 = vdwg.mxu0
        %v942 = vadd.f32 %v793, %v880
        %v943 = vadd.f32 %v794, %v900
        %v944 = vadd.f32 %v795, %v920
        %v945 = vadd.f32 %v796, %v940
        %v946 = vxor.u32 %v942, 2147483648
        %v947 = vmul.f32 %v946, 1.442695
        %v948 = vpow.pop %v947
        %v949 = vadd.f32 %v948, 1.0
        %v950 = vrcp.pop %v949
        %v951 = vmul.f32 %v949, %v950
        %v952 = vsub.f32 1.0, %v951
        %v953 = vmul.f32 %v950, %v952
        %v954 = vadd.f32 %v950, %v953
        %vm955 = vweird.f32 %v949
        %vm956 = vweird.f32 %v950
        %vm957 = vmor %vm955, %vm956
        %v958 = vsel %vm957, %v950, %v954
        %v959 = vand.u32 2147483647, %v949
        %vm960 = vcmp.eq.f32.partialorder %v959, 8.507059e+37
        %v961 = vand.u32 %v949, 2147483648
        %v962 = vor.u32 1.1754944e-38, %v961
        %v963 = vsel %vm960, %v962, %v958
        %v964 = vmul.f32 1.0, %v963
        %v965 = vxor.u32 %v943, 2147483648
        %v966 = vmul.f32 %v965, 1.442695
        %v967 = vpow.pop %v966
        %v968 = vadd.f32 %v967, 1.0
        %v969 = vrcp.pop %v968
        %v970 = vmul.f32 %v968, %v969
        %v971 = vsub.f32 1.0, %v970
        %v972 = vmul.f32 %v969, %v971
        %v973 = vadd.f32 %v969, %v972
        %vm974 = vweird.f32 %v968
        %vm975 = vweird.f32 %v969
        %vm976 = vmor %vm974, %vm975
        %v977 = vsel %vm976, %v969, %v973
        %v978 = vand.u32 2147483647, %v968
        %vm979 = vcmp.eq.f32.partialorder %v978, 8.507059e+37
        %v980 = vand.u32 %v968, 2147483648
        %v981 = vor.u32 1.1754944e-38, %v980
        %v982 = vsel %vm979, %v981, %v977
        %v983 = vmul.f32 1.0, %v982
        %v984 = vtanh.pop %v944
        %v985 = vxor.u32 %v945, 2147483648
        %v986 = vmul.f32 %v985, 1.442695
        %v987 = vpow.pop %v986
        %v988 = vadd.f32 %v987, 1.0
        %v989 = vrcp.pop %v988
        %v990 = vmul.f32 %v988, %v989
        %v991 = vsub.f32 1.0, %v990
        %v992 = vmul.f32 %v989, %v991
        %v993 = vadd.f32 %v989, %v992
        %vm994 = vweird.f32 %v988
        %vm995 = vweird.f32 %v989
        %vm996 = vmor %vm994, %vm995
        %v997 = vsel %vm996, %v989, %v993
        %v998 = vand.u32 2147483647, %v988
        %vm999 = vcmp.eq.f32.partialorder %v998, 8.507059e+37
        %v1000 = vand.u32 %v988, 2147483648
        %v1001 = vor.u32 1.1754944e-38, %v1000
        %v1002 = vsel %vm999, %v1001, %v997
        %v1003 = vmul.f32 1.0, %v1002
        %v1004 = vld [vmem:[#allocation3] sm:$0xff]
        %v1005 = vmul.f32 %v983, %v1004
        %v1006 = vmul.f32 %v964, %v984
        %v1007 = vadd.f32 %v1005, %v1006
        %v1008 = vtanh.pop %v1007
        %v1009 = vmul.f32 %v1003, %v1008
        %1010 = vst [vmem:[#allocation3] sm:$0xff] %v1007
        %1011 = vst [vmem:[#allocation2] sm:$0xff] %v1009
        %s1012 = scalar_lea.vmem [#allocation4], 8
        %1013 = vst [vmem:[%s1012] sm:$0xff] %v1009
        %s1014 = scalar_lea.vmem [#allocation5], 64
        %v1015 = vld [vmem:[%s1014] sm:$0xff]
        %v1016 = vld [vmem:[%s1014 + $0x8] sm:$0xff]
        %v1017 = vld [vmem:[%s1014 + $0x10] sm:$0xff]
        %v1018 = vld [vmem:[%s1014 + $0x18] sm:$0xff]
        %v1019 = vld [vmem:[#allocation2] sm:$0xff]
        %v1020 = vld [vmem:[#allocation11] sm:$0xff]
        %v1021 = vld [vmem:[#allocation11 + $0x8] sm:$0xff]
        %v1022 = vld [vmem:[#allocation11 + $0x10] sm:$0xff]
        %v1023 = vld [vmem:[#allocation11 + $0x18] sm:$0xff]
        %v1024 = vld [vmem:[#allocation11 + $0x20] sm:$0xff]
        %v1025 = vld [vmem:[#allocation11 + $0x28] sm:$0xff]
        %v1026 = vld [vmem:[#allocation11 + $0x30] sm:$0xff]
        %v1027 = vld [vmem:[#allocation11 + $0x38] sm:$0xff]
        %v1028 = vld [vmem:[#allocation11 + $0x40] sm:$0xff]
        %v1029 = vld [vmem:[#allocation11 + $0x48] sm:$0xff]
        %v1030 = vld [vmem:[#allocation11 + $0x50] sm:$0xff]
        %v1031 = vld [vmem:[#allocation11 + $0x58] sm:$0xff]
        %v1032 = vld [vmem:[#allocation11 + $0x60] sm:$0xff]
        %v1033 = vld [vmem:[#allocation11 + $0x68] sm:$0xff]
        %v1034 = vld [vmem:[#allocation11 + $0x70] sm:$0xff]
        %v1035 = vld [vmem:[#allocation11 + $0x78] sm:$0xff]
        %v1036 = vld [vmem:[#allocation11 + $0x80] sm:$0xff]
        %v1037 = vld [vmem:[#allocation11 + $0x88] sm:$0xff]
        %v1038 = vld [vmem:[#allocation11 + $0x90] sm:$0xff]
        %v1039 = vld [vmem:[#allocation11 + $0x98] sm:$0xff]
        %v1040 = vld [vmem:[#allocation11 + $0xa0] sm:$0xff]
        %v1041 = vld [vmem:[#allocation11 + $0xa8] sm:$0xff]
        %v1042 = vld [vmem:[#allocation11 + $0xb0] sm:$0xff]
        %v1043 = vld [vmem:[#allocation11 + $0xb8] sm:$0xff]
        %v1044 = vld [vmem:[#allocation11 + $0xc0] sm:$0xff]
        %v1045 = vld [vmem:[#allocation11 + $0xc8] sm:$0xff]
        %v1046 = vld [vmem:[#allocation11 + $0xd0] sm:$0xff]
        %v1047 = vld [vmem:[#allocation11 + $0xd8] sm:$0xff]
        %v1048 = vld [vmem:[#allocation11 + $0xe0] sm:$0xff]
        %v1049 = vld [vmem:[#allocation11 + $0xe8] sm:$0xff]
        %v1050 = vld [vmem:[#allocation11 + $0xf0] sm:$0xff]
        %v1051 = vld [vmem:[#allocation11 + $0xf8] sm:$0xff]
        %v1052 = vld [vmem:[#allocation11 + $0x100] sm:$0xff]
        %v1053 = vld [vmem:[#allocation11 + $0x108] sm:$0xff]
        %v1054 = vld [vmem:[#allocation11 + $0x110] sm:$0xff]
        %v1055 = vld [vmem:[#allocation11 + $0x118] sm:$0xff]
        %v1056 = vld [vmem:[#allocation11 + $0x120] sm:$0xff]
        %v1057 = vld [vmem:[#allocation11 + $0x128] sm:$0xff]
        %v1058 = vld [vmem:[#allocation11 + $0x130] sm:$0xff]
        %v1059 = vld [vmem:[#allocation11 + $0x138] sm:$0xff]
        %v1060 = vld [vmem:[#allocation11 + $0x140] sm:$0xff]
        %v1061 = vld [vmem:[#allocation11 + $0x148] sm:$0xff]
        %v1062 = vld [vmem:[#allocation11 + $0x150] sm:$0xff]
        %v1063 = vld [vmem:[#allocation11 + $0x158] sm:$0xff]
        %v1064 = vld [vmem:[#allocation11 + $0x160] sm:$0xff]
        %v1065 = vld [vmem:[#allocation11 + $0x168] sm:$0xff]
        %v1066 = vld [vmem:[#allocation11 + $0x170] sm:$0xff]
        %v1067 = vld [vmem:[#allocation11 + $0x178] sm:$0xff]
        %v1068 = vld [vmem:[#allocation11 + $0x180] sm:$0xff]
        %v1069 = vld [vmem:[#allocation11 + $0x188] sm:$0xff]
        %v1070 = vld [vmem:[#allocation11 + $0x190] sm:$0xff]
        %v1071 = vld [vmem:[#allocation11 + $0x198] sm:$0xff]
        %v1072 = vld [vmem:[#allocation11 + $0x1a0] sm:$0xff]
        %v1073 = vld [vmem:[#allocation11 + $0x1a8] sm:$0xff]
        %v1074 = vld [vmem:[#allocation11 + $0x1b0] sm:$0xff]
        %v1075 = vld [vmem:[#allocation11 + $0x1b8] sm:$0xff]
        %v1076 = vld [vmem:[#allocation11 + $0x1c0] sm:$0xff]
        %v1077 = vld [vmem:[#allocation11 + $0x1c8] sm:$0xff]
        %v1078 = vld [vmem:[#allocation11 + $0x1d0] sm:$0xff]
        %v1079 = vld [vmem:[#allocation11 + $0x1d8] sm:$0xff]
        %v1080 = vld [vmem:[#allocation11 + $0x1e0] sm:$0xff]
        %v1081 = vld [vmem:[#allocation11 + $0x1e8] sm:$0xff]
        %v1082 = vld [vmem:[#allocation11 + $0x1f0] sm:$0xff]
        %v1083 = vld [vmem:[#allocation11 + $0x1f8] sm:$0xff]
        %1084 = vmatpush.msra.mxu0 %v1080
        %1085 = vmatpush.msra.mxu0 %v1076
        %1086 = vmatpush.msra.mxu0 %v1072
        %1087 = vmatpush.msra.mxu0 %v1068
        %1088 = vmatpush.msra.mxu0 %v1064
        %1089 = vmatpush.msra.mxu0 %v1060
        %1090 = vmatpush.msra.mxu0 %v1056
        %1091 = vmatpush.msra.mxu0 %v1052
        %1092 = vmatpush.msra.mxu0 %v1048
        %1093 = vmatpush.msra.mxu0 %v1044
        %1094 = vmatpush.msra.mxu0 %v1040
        %1095 = vmatpush.msra.mxu0 %v1036
        %1096 = vmatpush.msra.mxu0 %v1032
        %1097 = vmatpush.msra.mxu0 %v1028
        %1098 = vmatpush.msra.mxu0 %v1024
        %1099 = vmatpush.msra.mxu0 %v1020
        %1100 = vmatmul.f32.gmra.mxu0 %v1019
        %v1101 = vpop.f32.mrf.mxu0
        %v1102 = vadd.f32 0.0, %v1101
        %1103 = vdwg.mxu0
        %1104 = vmatpush.msra.mxu0 %v1081
        %1105 = vmatpush.msra.mxu0 %v1077
        %1106 = vmatpush.msra.mxu0 %v1073
        %1107 = vmatpush.msra.mxu0 %v1069
        %1108 = vmatpush.msra.mxu0 %v1065
        %1109 = vmatpush.msra.mxu0 %v1061
        %1110 = vmatpush.msra.mxu0 %v1057
        %1111 = vmatpush.msra.mxu0 %v1053
        %1112 = vmatpush.msra.mxu0 %v1049
        %1113 = vmatpush.msra.mxu0 %v1045
        %1114 = vmatpush.msra.mxu0 %v1041
        %1115 = vmatpush.msra.mxu0 %v1037
        %1116 = vmatpush.msra.mxu0 %v1033
        %1117 = vmatpush.msra.mxu0 %v1029
        %1118 = vmatpush.msra.mxu0 %v1025
        %1119 = vmatpush.msra.mxu0 %v1021
        %1120 = vmatmul.f32.gmra.mxu0 %v1019
        %v1121 = vpop.f32.mrf.mxu0
        %v1122 = vadd.f32 0.0, %v1121
        %1123 = vdwg.mxu0
        %1124 = vmatpush.msra.mxu0 %v1082
        %1125 = vmatpush.msra.mxu0 %v1078
        %1126 = vmatpush.msra.mxu0 %v1074
        %1127 = vmatpush.msra.mxu0 %v1070
        %1128 = vmatpush.msra.mxu0 %v1066
        %1129 = vmatpush.msra.mxu0 %v1062
        %1130 = vmatpush.msra.mxu0 %v1058
        %1131 = vmatpush.msra.mxu0 %v1054
        %1132 = vmatpush.msra.mxu0 %v1050
        %1133 = vmatpush.msra.mxu0 %v1046
        %1134 = vmatpush.msra.mxu0 %v1042
        %1135 = vmatpush.msra.mxu0 %v1038
        %1136 = vmatpush.msra.mxu0 %v1034
        %1137 = vmatpush.msra.mxu0 %v1030
        %1138 = vmatpush.msra.mxu0 %v1026
        %1139 = vmatpush.msra.mxu0 %v1022
        %1140 = vmatmul.f32.gmra.mxu0 %v1019
        %v1141 = vpop.f32.mrf.mxu0
        %v1142 = vadd.f32 0.0, %v1141
        %1143 = vdwg.mxu0
        %1144 = vmatpush.msra.mxu0 %v1083
        %1145 = vmatpush.msra.mxu0 %v1079
        %1146 = vmatpush.msra.mxu0 %v1075
        %1147 = vmatpush.msra.mxu0 %v1071
        %1148 = vmatpush.msra.mxu0 %v1067
        %1149 = vmatpush.msra.mxu0 %v1063
        %1150 = vmatpush.msra.mxu0 %v1059
        %1151 = vmatpush.msra.mxu0 %v1055
        %1152 = vmatpush.msra.mxu0 %v1051
        %1153 = vmatpush.msra.mxu0 %v1047
        %1154 = vmatpush.msra.mxu0 %v1043
        %1155 = vmatpush.msra.mxu0 %v1039
        %1156 = vmatpush.msra.mxu0 %v1035
        %1157 = vmatpush.msra.mxu0 %v1031
        %1158 = vmatpush.msra.mxu0 %v1027
        %1159 = vmatpush.msra.mxu0 %v1023
        %1160 = vmatmul.f32.gmra.mxu0 %v1019
        %v1161 = vpop.f32.mrf.mxu0
        %v1162 = vadd.f32 0.0, %v1161
        %1163 = vdwg.mxu0
        %v1164 = vadd.f32 %v1015, %v1102
        %v1165 = vadd.f32 %v1016, %v1122
        %v1166 = vadd.f32 %v1017, %v1142
        %v1167 = vadd.f32 %v1018, %v1162
        %v1168 = vxor.u32 %v1164, 2147483648
        %v1169 = vmul.f32 %v1168, 1.442695
        %v1170 = vpow.pop %v1169
        %v1171 = vadd.f32 %v1170, 1.0
        %v1172 = vrcp.pop %v1171
        %v1173 = vmul.f32 %v1171, %v1172
        %v1174 = vsub.f32 1.0, %v1173
        %v1175 = vmul.f32 %v1172, %v1174
        %v1176 = vadd.f32 %v1172, %v1175
        %vm1177 = vweird.f32 %v1171
        %vm1178 = vweird.f32 %v1172
        %vm1179 = vmor %vm1177, %vm1178
        %v1180 = vsel %vm1179, %v1172, %v1176
        %v1181 = vand.u32 2147483647, %v1171
        %vm1182 = vcmp.eq.f32.partialorder %v1181, 8.507059e+37
        %v1183 = vand.u32 %v1171, 2147483648
        %v1184 = vor.u32 1.1754944e-38, %v1183
        %v1185 = vsel %vm1182, %v1184, %v1180
        %v1186 = vmul.f32 1.0, %v1185
        %v1187 = vxor.u32 %v1165, 2147483648
        %v1188 = vmul.f32 %v1187, 1.442695
        %v1189 = vpow.pop %v1188
        %v1190 = vadd.f32 %v1189, 1.0
        %v1191 = vrcp.pop %v1190
        %v1192 = vmul.f32 %v1190, %v1191
        %v1193 = vsub.f32 1.0, %v1192
        %v1194 = vmul.f32 %v1191, %v1193
        %v1195 = vadd.f32 %v1191, %v1194
        %vm1196 = vweird.f32 %v1190
        %vm1197 = vweird.f32 %v1191
        %vm1198 = vmor %vm1196, %vm1197
        %v1199 = vsel %vm1198, %v1191, %v1195
        %v1200 = vand.u32 2147483647, %v1190
        %vm1201 = vcmp.eq.f32.partialorder %v1200, 8.507059e+37
        %v1202 = vand.u32 %v1190, 2147483648
        %v1203 = vor.u32 1.1754944e-38, %v1202
        %v1204 = vsel %vm1201, %v1203, %v1199
        %v1205 = vmul.f32 1.0, %v1204
        %v1206 = vtanh.pop %v1166
        %v1207 = vxor.u32 %v1167, 2147483648
        %v1208 = vmul.f32 %v1207, 1.442695
        %v1209 = vpow.pop %v1208
        %v1210 = vadd.f32 %v1209, 1.0
        %v1211 = vrcp.pop %v1210
        %v1212 = vmul.f32 %v1210, %v1211
        %v1213 = vsub.f32 1.0, %v1212
        %v1214 = vmul.f32 %v1211, %v1213
        %v1215 = vadd.f32 %v1211, %v1214
        %vm1216 = vweird.f32 %v1210
        %vm1217 = vweird.f32 %v1211
        %vm1218 = vmor %vm1216, %vm1217
        %v1219 = vsel %vm1218, %v1211, %v1215
        %v1220 = vand.u32 2147483647, %v1210
        %vm1221 = vcmp.eq.f32.partialorder %v1220, 8.507059e+37
        %v1222 = vand.u32 %v1210, 2147483648
        %v1223 = vor.u32 1.1754944e-38, %v1222
        %v1224 = vsel %vm1221, %v1223, %v1219
        %v1225 = vmul.f32 1.0, %v1224
        %v1226 = vld [vmem:[#allocation3] sm:$0xff]
        %v1227 = vmul.f32 %v1205, %v1226
        %v1228 = vmul.f32 %v1186, %v1206
        %v1229 = vadd.f32 %v1227, %v1228
        %v1230 = vtanh.pop %v1229
        %v1231 = vmul.f32 %v1225, %v1230
        %1232 = vst [vmem:[#allocation3] sm:$0xff] %v1229
        %1233 = vst [vmem:[#allocation2] sm:$0xff] %v1231
        %s1234 = scalar_lea.vmem [#allocation4], 16
        %1235 = vst [vmem:[%s1234] sm:$0xff] %v1231
        %s1236 = scalar_lea.vmem [#allocation5], 96
        %v1237 = vld [vmem:[%s1236] sm:$0xff]
        %v1238 = vld [vmem:[%s1236 + $0x8] sm:$0xff]
        %v1239 = vld [vmem:[%s1236 + $0x10] sm:$0xff]
        %v1240 = vld [vmem:[%s1236 + $0x18] sm:$0xff]
        %v1241 = vld [vmem:[#allocation2] sm:$0xff]
        %v1242 = vld [vmem:[#allocation11] sm:$0xff]
        %v1243 = vld [vmem:[#allocation11 + $0x8] sm:$0xff]
        %v1244 = vld [vmem:[#allocation11 + $0x10] sm:$0xff]
        %v1245 = vld [vmem:[#allocation11 + $0x18] sm:$0xff]
        %v1246 = vld [vmem:[#allocation11 + $0x20] sm:$0xff]
        %v1247 = vld [vmem:[#allocation11 + $0x28] sm:$0xff]
        %v1248 = vld [vmem:[#allocation11 + $0x30] sm:$0xff]
        %v1249 = vld [vmem:[#allocation11 + $0x38] sm:$0xff]
        %v1250 = vld [vmem:[#allocation11 + $0x40] sm:$0xff]
        %v1251 = vld [vmem:[#allocation11 + $0x48] sm:$0xff]
        %v1252 = vld [vmem:[#allocation11 + $0x50] sm:$0xff]
        %v1253 = vld [vmem:[#allocation11 + $0x58] sm:$0xff]
        %v1254 = vld [vmem:[#allocation11 + $0x60] sm:$0xff]
        %v1255 = vld [vmem:[#allocation11 + $0x68] sm:$0xff]
        %v1256 = vld [vmem:[#allocation11 + $0x70] sm:$0xff]
        %v1257 = vld [vmem:[#allocation11 + $0x78] sm:$0xff]
        %v1258 = vld [vmem:[#allocation11 + $0x80] sm:$0xff]
        %v1259 = vld [vmem:[#allocation11 + $0x88] sm:$0xff]
        %v1260 = vld [vmem:[#allocation11 + $0x90] sm:$0xff]
        %v1261 = vld [vmem:[#allocation11 + $0x98] sm:$0xff]
        %v1262 = vld [vmem:[#allocation11 + $0xa0] sm:$0xff]
        %v1263 = vld [vmem:[#allocation11 + $0xa8] sm:$0xff]
        %v1264 = vld [vmem:[#allocation11 + $0xb0] sm:$0xff]
        %v1265 = vld [vmem:[#allocation11 + $0xb8] sm:$0xff]
        %v1266 = vld [vmem:[#allocation11 + $0xc0] sm:$0xff]
        %v1267 = vld [vmem:[#allocation11 + $0xc8] sm:$0xff]
        %v1268 = vld [vmem:[#allocation11 + $0xd0] sm:$0xff]
        %v1269 = vld [vmem:[#allocation11 + $0xd8] sm:$0xff]
        %v1270 = vld [vmem:[#allocation11 + $0xe0] sm:$0xff]
        %v1271 = vld [vmem:[#allocation11 + $0xe8] sm:$0xff]
        %v1272 = vld [vmem:[#allocation11 + $0xf0] sm:$0xff]
        %v1273 = vld [vmem:[#allocation11 + $0xf8] sm:$0xff]
        %v1274 = vld [vmem:[#allocation11 + $0x100] sm:$0xff]
        %v1275 = vld [vmem:[#allocation11 + $0x108] sm:$0xff]
        %v1276 = vld [vmem:[#allocation11 + $0x110] sm:$0xff]
        %v1277 = vld [vmem:[#allocation11 + $0x118] sm:$0xff]
        %v1278 = vld [vmem:[#allocation11 + $0x120] sm:$0xff]
        %v1279 = vld [vmem:[#allocation11 + $0x128] sm:$0xff]
        %v1280 = vld [vmem:[#allocation11 + $0x130] sm:$0xff]
        %v1281 = vld [vmem:[#allocation11 + $0x138] sm:$0xff]
        %v1282 = vld [vmem:[#allocation11 + $0x140] sm:$0xff]
        %v1283 = vld [vmem:[#allocation11 + $0x148] sm:$0xff]
        %v1284 = vld [vmem:[#allocation11 + $0x150] sm:$0xff]
        %v1285 = vld [vmem:[#allocation11 + $0x158] sm:$0xff]
        %v1286 = vld [vmem:[#allocation11 + $0x160] sm:$0xff]
        %v1287 = vld [vmem:[#allocation11 + $0x168] sm:$0xff]
        %v1288 = vld [vmem:[#allocation11 + $0x170] sm:$0xff]
        %v1289 = vld [vmem:[#allocation11 + $0x178] sm:$0xff]
        %v1290 = vld [vmem:[#allocation11 + $0x180] sm:$0xff]
        %v1291 = vld [vmem:[#allocation11 + $0x188] sm:$0xff]
        %v1292 = vld [vmem:[#allocation11 + $0x190] sm:$0xff]
        %v1293 = vld [vmem:[#allocation11 + $0x198] sm:$0xff]
        %v1294 = vld [vmem:[#allocation11 + $0x1a0] sm:$0xff]
        %v1295 = vld [vmem:[#allocation11 + $0x1a8] sm:$0xff]
        %v1296 = vld [vmem:[#allocation11 + $0x1b0] sm:$0xff]
        %v1297 = vld [vmem:[#allocation11 + $0x1b8] sm:$0xff]
        %v1298 = vld [vmem:[#allocation11 + $0x1c0] sm:$0xff]
        %v1299 = vld [vmem:[#allocation11 + $0x1c8] sm:$0xff]
        %v1300 = vld [vmem:[#allocation11 + $0x1d0] sm:$0xff]
        %v1301 = vld [vmem:[#allocation11 + $0x1d8] sm:$0xff]
        %v1302 = vld [vmem:[#allocation11 + $0x1e0] sm:$0xff]
        %v1303 = vld [vmem:[#allocation11 + $0x1e8] sm:$0xff]
        %v1304 = vld [vmem:[#allocation11 + $0x1f0] sm:$0xff]
        %v1305 = vld [vmem:[#allocation11 + $0x1f8] sm:$0xff]
        %1306 = vmatpush.msra.mxu0 %v1302
        %1307 = vmatpush.msra.mxu0 %v1298
        %1308 = vmatpush.msra.mxu0 %v1294
        %1309 = vmatpush.msra.mxu0 %v1290
        %1310 = vmatpush.msra.mxu0 %v1286
        %1311 = vmatpush.msra.mxu0 %v1282
        %1312 = vmatpush.msra.mxu0 %v1278
        %1313 = vmatpush.msra.mxu0 %v1274
        %1314 = vmatpush.msra.mxu0 %v1270
        %1315 = vmatpush.msra.mxu0 %v1266
        %1316 = vmatpush.msra.mxu0 %v1262
        %1317 = vmatpush.msra.mxu0 %v1258
        %1318 = vmatpush.msra.mxu0 %v1254
        %1319 = vmatpush.msra.mxu0 %v1250
        %1320 = vmatpush.msra.mxu0 %v1246
        %1321 = vmatpush.msra.mxu0 %v1242
        %1322 = vmatmul.f32.gmra.mxu0 %v1241
        %v1323 = vpop.f32.mrf.mxu0
        %v1324 = vadd.f32 0.0, %v1323
        %1325 = vdwg.mxu0
        %1326 = vmatpush.msra.mxu0 %v1303
        %1327 = vmatpush.msra.mxu0 %v1299
        %1328 = vmatpush.msra.mxu0 %v1295
        %1329 = vmatpush.msra.mxu0 %v1291
        %1330 = vmatpush.msra.mxu0 %v1287
        %1331 = vmatpush.msra.mxu0 %v1283
        %1332 = vmatpush.msra.mxu0 %v1279
        %1333 = vmatpush.msra.mxu0 %v1275
        %1334 = vmatpush.msra.mxu0 %v1271
        %1335 = vmatpush.msra.mxu0 %v1267
        %1336 = vmatpush.msra.mxu0 %v1263
        %1337 = vmatpush.msra.mxu0 %v1259
        %1338 = vmatpush.msra.mxu0 %v1255
        %1339 = vmatpush.msra.mxu0 %v1251
        %1340 = vmatpush.msra.mxu0 %v1247
        %1341 = vmatpush.msra.mxu0 %v1243
        %1342 = vmatmul.f32.gmra.mxu0 %v1241
        %v1343 = vpop.f32.mrf.mxu0
        %v1344 = vadd.f32 0.0, %v1343
        %1345 = vdwg.mxu0
        %1346 = vmatpush.msra.mxu0 %v1304
        %1347 = vmatpush.msra.mxu0 %v1300
        %1348 = vmatpush.msra.mxu0 %v1296
        %1349 = vmatpush.msra.mxu0 %v1292
        %1350 = vmatpush.msra.mxu0 %v1288
        %1351 = vmatpush.msra.mxu0 %v1284
        %1352 = vmatpush.msra.mxu0 %v1280
        %1353 = vmatpush.msra.mxu0 %v1276
        %1354 = vmatpush.msra.mxu0 %v1272
        %1355 = vmatpush.msra.mxu0 %v1268
        %1356 = vmatpush.msra.mxu0 %v1264
        %1357 = vmatpush.msra.mxu0 %v1260
        %1358 = vmatpush.msra.mxu0 %v1256
        %1359 = vmatpush.msra.mxu0 %v1252
        %1360 = vmatpush.msra.mxu0 %v1248
        %1361 = vmatpush.msra.mxu0 %v1244
        %1362 = vmatmul.f32.gmra.mxu0 %v1241
        %v1363 = vpop.f32.mrf.mxu0
        %v1364 = vadd.f32 0.0, %v1363
        %1365 = vdwg.mxu0
        %1366 = vmatpush.msra.mxu0 %v1305
        %1367 = vmatpush.msra.mxu0 %v1301
        %1368 = vmatpush.msra.mxu0 %v1297
        %1369 = vmatpush.msra.mxu0 %v1293
        %1370 = vmatpush.msra.mxu0 %v1289
        %1371 = vmatpush.msra.mxu0 %v1285
        %1372 = vmatpush.msra.mxu0 %v1281
        %1373 = vmatpush.msra.mxu0 %v1277
        %1374 = vmatpush.msra.mxu0 %v1273
        %1375 = vmatpush.msra.mxu0 %v1269
        %1376 = vmatpush.msra.mxu0 %v1265
        %1377 = vmatpush.msra.mxu0 %v1261
        %1378 = vmatpush.msra.mxu0 %v1257
        %1379 = vmatpush.msra.mxu0 %v1253
        %1380 = vmatpush.msra.mxu0 %v1249
        %1381 = vmatpush.msra.mxu0 %v1245
        %1382 = vmatmul.f32.gmra.mxu0 %v1241
        %v1383 = vpop.f32.mrf.mxu0
        %v1384 = vadd.f32 0.0, %v1383
        %1385 = vdwg.mxu0
        %v1386 = vadd.f32 %v1237, %v1324
        %v1387 = vadd.f32 %v1238, %v1344
        %v1388 = vadd.f32 %v1239, %v1364
        %v1389 = vadd.f32 %v1240, %v1384
        %v1390 = vxor.u32 %v1386, 2147483648
        %v1391 = vmul.f32 %v1390, 1.442695
        %v1392 = vpow.pop %v1391
        %v1393 = vadd.f32 %v1392, 1.0
        %v1394 = vrcp.pop %v1393
        %v1395 = vmul.f32 %v1393, %v1394
        %v1396 = vsub.f32 1.0, %v1395
        %v1397 = vmul.f32 %v1394, %v1396
        %v1398 = vadd.f32 %v1394, %v1397
        %vm1399 = vweird.f32 %v1393
        %vm1400 = vweird.f32 %v1394
        %vm1401 = vmor %vm1399, %vm1400
        %v1402 = vsel %vm1401, %v1394, %v1398
        %v1403 = vand.u32 2147483647, %v1393
        %vm1404 = vcmp.eq.f32.partialorder %v1403, 8.507059e+37
        %v1405 = vand.u32 %v1393, 2147483648
        %v1406 = vor.u32 1.1754944e-38, %v1405
        %v1407 = vsel %vm1404, %v1406, %v1402
        %v1408 = vmul.f32 1.0, %v1407
        %v1409 = vxor.u32 %v1387, 2147483648
        %v1410 = vmul.f32 %v1409, 1.442695
        %v1411 = vpow.pop %v1410
        %v1412 = vadd.f32 %v1411, 1.0
        %v1413 = vrcp.pop %v1412
        %v1414 = vmul.f32 %v1412, %v1413
        %v1415 = vsub.f32 1.0, %v1414
        %v1416 = vmul.f32 %v1413, %v1415
        %v1417 = vadd.f32 %v1413, %v1416
        %vm1418 = vweird.f32 %v1412
        %vm1419 = vweird.f32 %v1413
        %vm1420 = vmor %vm1418, %vm1419
        %v1421 = vsel %vm1420, %v1413, %v1417
        %v1422 = vand.u32 2147483647, %v1412
        %vm1423 = vcmp.eq.f32.partialorder %v1422, 8.507059e+37
        %v1424 = vand.u32 %v1412, 2147483648
        %v1425 = vor.u32 1.1754944e-38, %v1424
        %v1426 = vsel %vm1423, %v1425, %v1421
        %v1427 = vmul.f32 1.0, %v1426
        %v1428 = vtanh.pop %v1388
        %v1429 = vxor.u32 %v1389, 2147483648
        %v1430 = vmul.f32 %v1429, 1.442695
        %v1431 = vpow.pop %v1430
        %v1432 = vadd.f32 %v1431, 1.0
        %v1433 = vrcp.pop %v1432
        %v1434 = vmul.f32 %v1432, %v1433
        %v1435 = vsub.f32 1.0, %v1434
        %v1436 = vmul.f32 %v1433, %v1435
        %v1437 = vadd.f32 %v1433, %v1436
        %vm1438 = vweird.f32 %v1432
        %vm1439 = vweird.f32 %v1433
        %vm1440 = vmor %vm1438, %vm1439
        %v1441 = vsel %vm1440, %v1433, %v1437
        %v1442 = vand.u32 2147483647, %v1432
        %vm1443 = vcmp.eq.f32.partialorder %v1442, 8.507059e+37
        %v1444 = vand.u32 %v1432, 2147483648
        %v1445 = vor.u32 1.1754944e-38, %v1444
        %v1446 = vsel %vm1443, %v1445, %v1441
        %v1447 = vmul.f32 1.0, %v1446
        %v1448 = vld [vmem:[#allocation3] sm:$0xff]
        %v1449 = vmul.f32 %v1427, %v1448
        %v1450 = vmul.f32 %v1408, %v1428
        %v1451 = vadd.f32 %v1449, %v1450
        %v1452 = vtanh.pop %v1451
        %v1453 = vmul.f32 %v1447, %v1452
        %1454 = vst [vmem:[#allocation3] sm:$0xff] %v1451
        %1455 = vst [vmem:[#allocation2] sm:$0xff] %v1453
        %s1456 = scalar_lea.vmem [#allocation4], 24
        %1457 = vst [vmem:[%s1456] sm:$0xff] %v1453
        %v1458 = vld [vmem:[#allocation4] sm:$0xff]
        %v1459 = vld [vmem:[#allocation4 + $0x8] sm:$0xff]
        %v1460 = vld [vmem:[#allocation4 + $0x10] sm:$0xff]
        %v1461 = vld [vmem:[#allocation4 + $0x18] sm:$0xff]
        %v1462 = vld [vmem:[#allocation14] sm:$0xff]
        %v1463 = vld [vmem:[#allocation14 + $0x8] sm:$0xff]
        %v1464 = vld [vmem:[#allocation14 + $0x10] sm:$0xff]
        %v1465 = vld [vmem:[#allocation14 + $0x18] sm:$0xff]
        %v1466 = vld [vmem:[#allocation14 + $0x20] sm:$0xff]
        %v1467 = vld [vmem:[#allocation14 + $0x28] sm:$0xff]
        %v1468 = vld [vmem:[#allocation14 + $0x30] sm:$0xff]
        %v1469 = vld [vmem:[#allocation14 + $0x38] sm:$0xff]
        %v1470 = vld [vmem:[#allocation14 + $0x40] sm:$0xff]
        %v1471 = vld [vmem:[#allocation14 + $0x48] sm:$0xff]
        %v1472 = vld [vmem:[#allocation14 + $0x50] sm:$0xff]
        %v1473 = vld [vmem:[#allocation14 + $0x58] sm:$0xff]
        %v1474 = vld [vmem:[#allocation14 + $0x60] sm:$0xff]
        %v1475 = vld [vmem:[#allocation14 + $0x68] sm:$0xff]
        %v1476 = vld [vmem:[#allocation14 + $0x70] sm:$0xff]
        %v1477 = vld [vmem:[#allocation14 + $0x78] sm:$0xff]
        %v1478 = vld [vmem:[%s5] sm:$0x1]
        %v1480 = vperm.slane %v1478, 0
        %1482 = vmatpush.msra.mxu0 %v1477
        %1483 = vmatpush.msra.mxu0 %v1476
        %1484 = vmatpush.msra.mxu0 %v1475
        %1485 = vmatpush.msra.mxu0 %v1474
        %1486 = vmatpush.msra.mxu0 %v1473
        %1487 = vmatpush.msra.mxu0 %v1472
        %1488 = vmatpush.msra.mxu0 %v1471
        %1489 = vmatpush.msra.mxu0 %v1470
        %1490 = vmatpush.msra.mxu0 %v1469
        %1491 = vmatpush.msra.mxu0 %v1468
        %1492 = vmatpush.msra.mxu0 %v1467
        %1493 = vmatpush.msra.mxu0 %v1466
        %1494 = vmatpush.msra.mxu0 %v1465
        %1495 = vmatpush.msra.mxu0 %v1464
        %1496 = vmatpush.msra.mxu0 %v1463
        %1497 = vmatpush.msra.mxu0 %v1462
        %1498 = vmatmul.f32.gmra.mxu0 %v1458
        %v1499 = vpop.f32.mrf.mxu0
        %v1500 = vadd.f32 %v1480, %v1499
        %1501 = vmatmul.f32.gmra.mxu0 %v1459
        %v1502 = vpop.f32.mrf.mxu0
        %v1503 = vadd.f32 %v1480, %v1502
        %1504 = vmatmul.f32.gmra.mxu0 %v1460
        %v1505 = vpop.f32.mrf.mxu0
        %v1506 = vadd.f32 %v1480, %v1505
        %1507 = vmatmul.f32.gmra.mxu0 %v1461
        %v1508 = vpop.f32.mrf.mxu0
        %v1509 = vadd.f32 %v1480, %v1508
        %1510 = vdwg.mxu0
        %1511 = vst [vmem:[%s353] sm:$0xff] %v1500
        %1512 = vst [vmem:[%s353 + $0x8] sm:$0xff] %v1503
        %1513 = vst [vmem:[%s353 + $0x10] sm:$0xff] %v1506
        %1514 = vst [vmem:[%s353 + $0x18] sm:$0xff] %v1509
        %s1515 = sand.u32 %s180, 1
        %s1516 = scalar_lea.sflag [#allocation8], %s1515
        %s1517 = sand.u32 %s180, 1
        %s1518 = smul.addr %s1517, 32
        %s1519 = scalar_lea.vmem [#allocation15], %s1518
        // Predicated region
        $region69: #{tpu_custom_call.1} parent=43 // pred_check
          %p1520 = pneg %p190
        $region70: #{tpu_custom_call.1} parent=43 // pred_check_branch
          %1522 = sbr.rel (%p1520) target = $region72
        $region71: #{tpu_custom_call.1} parent=43 // pred_region
          %s1523 = smul.u32 4, %s30
          %1525 = vsyncadd %s1516, 0
          %s1526 = smul.addr %s1523, 2
          %s1527 = sadd.s32 %s29, %s1526
          %s1528 = smul.addr %s1527, 8
          %s1529 = scalar_lea.hbm %s6, %s1528
          %s1530 = sshll.u32 %s1519, 4
          %s1531 = int_to_ptr.vmem [resolvable:$true] %s1530
          %s1532 = sshll.u32 %s1529, 4
          %s1533 = int_to_ptr.hbm [resolvable:$true] %s1532
          %1538 = dma.vmem_to_hbm [thread:$0]  %s1531, 512, %s1533, %s1516, 128, 256, 8
        $region72: #{tpu_custom_call.1} parent=43 // pred_fallthru
          _
      $region44: #{tpu_custom_call.1} parent=5 // pred_fallthru
        _
      %p1539 = scmp.le.s32.totalorder 2, %s20
      // Predicated region
      $region73: #{tpu_custom_call.1} parent=5 // pred_check
        %p1540 = pneg %p1539
      $region74: #{tpu_custom_call.1} parent=5 // pred_check_branch
        %1542 = sbr.rel (%p1540) target = $region76
      $region75: #{tpu_custom_call.1} parent=5 // pred_region
        %s1543 = ssub.s32 %s20, 2
        // Predicated region
        $region77: #{tpu_custom_call.1} parent=75 // pred_check
          %p1544 = pneg %p196
        $region78: #{tpu_custom_call.1} parent=75 // pred_check_branch
          %1546 = sbr.rel (%p1544) target = $region80
        $region79: #{tpu_custom_call.1} parent=75 // pred_region
          %s1547 = sand.u32 %s181, 1
          %s1548 = scalar_lea.sflag [#allocation8], %s1547
          %s1549 = sand.u32 %s181, 1
          %s1550 = smul.addr %s1549, 32
          %s1551 = scalar_lea.vmem [#allocation15], %s1550
          %1553 = dma.done %s1548, 512
        $region80: #{tpu_custom_call.1} parent=75 // pred_fallthru
          _
      $region76: #{tpu_custom_call.1} parent=5 // pred_fallthru
        _
    $region6: #{tpu_custom_call.1} parent=1 // loop_footer
      %s24 = sadd.s32 1, %s20
    $region7: #{tpu_custom_call.1} parent=1 // loop_footer_branch
      %19 = sbr.rel target = $region3
    $region8: #{tpu_custom_call.1} parent=1 // loop_exit
      _
    %1554 = vsyncpa [#allocation7], 1
    %s1555 = scalar_lea.sflag [#allocation7], 1
    %1556 = vsyncpa %s1555, 1
    %1557 = vsyncpa [#allocation10], 1
    %1558 = vsyncpa [#allocation13], 1
    %1559 = vsyncpa [#allocation8], 1
    %s1560 = scalar_lea.sflag [#allocation8], 1
    %1561 = vsyncpa %s1560, 1

</llo_original>
